<compile_context>
chip_gen: v5e
topology: v5e:2x2
jax: 0.10.0
libtpu: 0.0.40
codegen_flags: <defaults>
</compile_context>

<pallas_src>
import jax
import jax.numpy as jnp
from jax.experimental import pallas as pl
from jax.experimental.pallas import tpu as pltpu

HIDDEN = 256  # fc1/fc2 width from the PyTorch module


def critic_kernel(xa_ref, wA_ref, b1_ref, w2x_ref, b2_ref, w3_ref, b3_ref, out_ref):
    H = HIDDEN
    xa = xa_ref[...]                                               # [Bt, Dpad]

    # One fused MXU matmul gives both the fc1 pre-activation and the action
    # contribution to fc2:  [x@W1 | a@W2a] = xa_padded @ [W1_pad | W2a_pad].
    fused = jnp.dot(xa, wA_ref[...], preferred_element_type=jnp.float32)  # [Bt, 2H]

    h1 = jnp.maximum(fused[:, :H] + b1_ref[...], 0.0)              # relu(fc1)   [Bt, H]
    a_term = fused[:, H:]                                          # a @ W2a     [Bt, H]

    # fc2 on concat([h1, a], 1) == h1 @ W2x + a @ W2a + b2 (split matmul), relu.
    h2 = jnp.maximum(
        jnp.dot(h1, w2x_ref[...], preferred_element_type=jnp.float32)
        + a_term + b2_ref[...],
        0.0)                                                       # [Bt, H]

    # fc3 (K=256 -> N=1): VPU multiply + XLU lane reduction instead of an
    # N=1 MXU matmul (which would use 1/256 of the MXU and pay full drain).
    q = jnp.sum(h2 * w3_ref[...], axis=-1, keepdims=True) + b3_ref[...]   # [Bt, 1]
    out_ref[...] = q


def init_params(key, n_obs, n_actions, hidden=HIDDEN):
    """nn.Linear-style U(-1/sqrt(fan_in), 1/sqrt(fan_in)) init,
    with fc3.weight * 0.1 and fc3.bias * 0.0 as in the PyTorch __init__."""
    k1, k2, k3, k4, k5 = jax.random.split(key, 5)

    def uni(k, shape, fan_in):
        bound = 1.0 / jnp.sqrt(jnp.float32(fan_in))
        return jax.random.uniform(k, shape, jnp.float32, -bound, bound)

    w1 = uni(k1, (n_obs, hidden), n_obs)                     # fc1: n_obs -> hidden
    b1 = uni(k2, (1, hidden), n_obs)
    fan2 = hidden + n_actions
    w2 = uni(k3, (fan2, hidden), fan2)                       # fc2: hidden+n_act -> hidden
    b2 = uni(k4, (1, hidden), fan2)
    w3 = uni(k5, (hidden, 1), hidden) * 0.1                  # fc3.weight.mul_(0.1)
    b3 = jnp.zeros((1, 1), jnp.float32)                      # fc3.bias.mul_(0.0)
    return (w1, b1, w2, b2, w3, b3)


def pack_params(params, n_obs, n_actions, hidden=HIDDEN):
    """One-time packing into the kernel layout (do this once; weights then stay
    VMEM-resident across grid steps inside the kernel)."""
    w1, b1, w2, b2, w3, b3 = params
    d_in = n_obs + n_actions
    d_pad = ((d_in + 127) // 128) * 128                      # lane-pad the K dim

    w2x = w2[:hidden]                                        # multiplies h1
    w2a = w2[hidden:]                                        # multiplies a

    # Fused, zero-padded first-stage weight: [W1_pad | W2a_pad] : [d_pad, 2H]
    wA = jnp.zeros((d_pad, 2 * hidden), jnp.float32)
    wA = wA.at[:n_obs, :hidden].set(w1)
    wA = wA.at[n_obs:d_in, hidden:].set(w2a)

    return (wA,
            b1.reshape(1, hidden),
            w2x,
            b2.reshape(1, hidden),
            w3.reshape(1, hidden),                           # fc3 weight as a row
            b3.reshape(1, 1))


def critic_forward(x, a, packed, block_b=256):
    """x: [B, n_obs], a: [B, n_actions] -> q: [B, 1] (float32)."""
    wA, b1, w2x, b2, w3_row, b3 = packed
    d_pad = wA.shape[0]
    H = w2x.shape[0]
    B = x.shape[0]

    # Pad the batch to a multiple of the tile (sublane/tile friendly); padded
    # rows are all-zero and sliced off below.
    B_pad = ((B + block_b - 1) // block_b) * block_b
    xa = jnp.concatenate([x, a], axis=1)
    xa = jnp.pad(xa, ((0, B_pad - B), (0, d_pad - xa.shape[1])))

    grid = (B_pad // block_b,)

    act_spec = pl.BlockSpec((block_b, d_pad), lambda i: (i, 0))
    out_spec = pl.BlockSpec((block_b, 1), lambda i: (i, 0))

    def resident(arr):
        # Full-array block, constant index -> stays resident in VMEM across the grid.
        return pl.BlockSpec(arr.shape, lambda i: (0, 0))

    flops = 2 * B_pad * d_pad * 2 * H + 2 * B_pad * H * H + 2 * B_pad * H
    bytes_accessed = 4 * (xa.size + wA.size + w2x.size + 3 * H + 1 + B_pad)

    q = pl.pallas_call(
        critic_kernel,
        out_shape=jax.ShapeDtypeStruct((B_pad, 1), jnp.float32),
        grid=grid,
        in_specs=[
            act_spec,
            resident(wA),
            resident(b1),
            resident(w2x),
            resident(b2),
            resident(w3_row),
            resident(b3),
        ],
        out_specs=out_spec,
        compiler_params=pltpu.CompilerParams(
            dimension_semantics=("parallel",),          # megacore-shard the batch
            vmem_limit_bytes=32 * 1024 * 1024,          # explicit; tile sized for v7x
        ),
        cost_estimate=pl.CostEstimate(
            flops=int(flops), transcendentals=0, bytes_accessed=int(bytes_accessed)),
    )(xa, wA, b1, w2x, b2, w3_row, b3)

    return q[:B]


def critic_reference(x, a, params):
    w1, b1, w2, b2, w3, b3 = params
    h1 = jnp.maximum(x @ w1 + b1, 0.0)
    h2 = jnp.maximum(jnp.concatenate([h1, a], axis=1) @ w2 + b2, 0.0)
    return h2 @ w3 + b3


if __name__ == "__main__":
    B, n_obs, n_actions = 4, 32, 8
    key = jax.random.PRNGKey(0)
    kx, ka, kp = jax.random.split(key, 3)

    x = jax.random.normal(kx, (B, n_obs), jnp.float32)
    a = jax.random.normal(ka, (B, n_actions), jnp.float32)

    params = init_params(kp, n_obs, n_actions)
    packed = pack_params(params, n_obs, n_actions)   # one-time weight packing

    q = critic_forward(x, a, packed)
    q = jax.block_until_ready(q)

    q_ref = critic_reference(x, a, params)
    assert q.shape == (B, 1), q.shape
    assert jnp.allclose(q, q_ref, atol=1e-4, rtol=1e-4), (q, q_ref)

    print("KERNEL_OK")
</pallas_src>

<mosaic_0001>
module attributes {stable_mosaic.version = 11 : i64} {
  func.func @critic_kernel(%arg0: i32, %arg1: memref<256x128xf32, #tpu.memory_space<vmem>>, %arg2: memref<128x512xf32, #tpu.memory_space<vmem>>, %arg3: memref<1x256xf32, #tpu.memory_space<vmem>>, %arg4: memref<256x256xf32, #tpu.memory_space<vmem>>, %arg5: memref<1x256xf32, #tpu.memory_space<vmem>>, %arg6: memref<1x256xf32, #tpu.memory_space<vmem>>, %arg7: memref<1x1xf32, #tpu.memory_space<vmem>>, %arg8: memref<256x1xf32, #tpu.memory_space<vmem>>) attributes {dimension_semantics = [#tpu.dimension_semantics<parallel>], iteration_bounds = array<i64: 1>, scalar_prefetch = 0 : i64, scratch_operands = 0 : i64, tpu.core_type = #tpu.core_type<tc>, window_params = [{transform_indices = @transform_0, window_bounds = array<i64: 256, 128>}, {pipeline_mode = #tpu.pipeline_mode<synchronous>, transform_indices = @transform_1, window_bounds = array<i64: 128, 512>}, {pipeline_mode = #tpu.pipeline_mode<synchronous>, transform_indices = @transform_2, window_bounds = array<i64: 1, 256>}, {pipeline_mode = #tpu.pipeline_mode<synchronous>, transform_indices = @transform_3, window_bounds = array<i64: 256, 256>}, {pipeline_mode = #tpu.pipeline_mode<synchronous>, transform_indices = @transform_4, window_bounds = array<i64: 1, 256>}, {pipeline_mode = #tpu.pipeline_mode<synchronous>, transform_indices = @transform_5, window_bounds = array<i64: 1, 256>}, {pipeline_mode = #tpu.pipeline_mode<synchronous>, transform_indices = @transform_6, window_bounds = array<i64: 1, 1>}, {transform_indices = @transform_7, window_bounds = array<i64: 256, 1>}]} {
    %c0 = arith.constant 0 : index
    %c0_0 = arith.constant 0 : index
    %0 = vector.load %arg1[%c0, %c0_0] : memref<256x128xf32, #tpu.memory_space<vmem>>, vector<256x128xf32>
    %c0_1 = arith.constant 0 : index
    %c0_2 = arith.constant 0 : index
    %1 = vector.load %arg2[%c0_1, %c0_2] : memref<128x512xf32, #tpu.memory_space<vmem>>, vector<128x512xf32>
    %cst = arith.constant dense<0.000000e+00> : vector<256x512xf32>
    %2 = tpu.matmul %0, %1, %cst {dimension_numbers = #tpu.dot_dimension_numbers<[1], [0], [0], [1], [0, 0, 1, 1], [], []>} : vector<256x128xf32>, vector<128x512xf32>, vector<256x512xf32> -> vector<256x512xf32>
    %3 = vector.extract_strided_slice %2 {offsets = [0, 0], sizes = [256, 256], strides = [1, 1]} : vector<256x512xf32> to vector<256x256xf32>
    %c0_3 = arith.constant 0 : index
    %c0_4 = arith.constant 0 : index
    %4 = vector.load %arg3[%c0_3, %c0_4] : memref<1x256xf32, #tpu.memory_space<vmem>>, vector<1x256xf32>
    %5 = vector.broadcast %4 : vector<1x256xf32> to vector<256x256xf32>
    %6 = arith.addf %3, %5 : vector<256x256xf32>
    %cst_5 = arith.constant 0.000000e+00 : f32
    %7 = vector.broadcast %cst_5 : f32 to vector<256x256xf32>
    %8 = arith.maximumf %6, %7 : vector<256x256xf32>
    %9 = vector.extract_strided_slice %2 {offsets = [0, 256], sizes = [256, 256], strides = [1, 1]} : vector<256x512xf32> to vector<256x256xf32>
    %c0_6 = arith.constant 0 : index
    %c0_7 = arith.constant 0 : index
    %10 = vector.load %arg4[%c0_6, %c0_7] : memref<256x256xf32, #tpu.memory_space<vmem>>, vector<256x256xf32>
    %cst_8 = arith.constant dense<0.000000e+00> : vector<256x256xf32>
    %11 = tpu.matmul %8, %10, %cst_8 {dimension_numbers = #tpu.dot_dimension_numbers<[1], [0], [0], [1], [0, 0, 1, 1], [], []>} : vector<256x256xf32>, vector<256x256xf32>, vector<256x256xf32> -> vector<256x256xf32>
    %12 = arith.addf %11, %9 : vector<256x256xf32>
    %c0_9 = arith.constant 0 : index
    %c0_10 = arith.constant 0 : index
    %13 = vector.load %arg5[%c0_9, %c0_10] : memref<1x256xf32, #tpu.memory_space<vmem>>, vector<1x256xf32>
    %14 = vector.broadcast %13 : vector<1x256xf32> to vector<256x256xf32>
    %15 = arith.addf %12, %14 : vector<256x256xf32>
    %cst_11 = arith.constant 0.000000e+00 : f32
    %16 = vector.broadcast %cst_11 : f32 to vector<256x256xf32>
    %17 = arith.maximumf %15, %16 : vector<256x256xf32>
    %c0_12 = arith.constant 0 : index
    %c0_13 = arith.constant 0 : index
    %18 = vector.load %arg6[%c0_12, %c0_13] : memref<1x256xf32, #tpu.memory_space<vmem>>, vector<1x256xf32>
    %19 = vector.broadcast %18 : vector<1x256xf32> to vector<256x256xf32>
    %20 = arith.mulf %17, %19 : vector<256x256xf32>
    %cst_14 = arith.constant dense<0.000000e+00> : vector<256xf32>
    %21 = vector.multi_reduction <add>, %20, %cst_14 [1] : vector<256x256xf32> to vector<256xf32>
    %22 = vector.shape_cast %21 : vector<256xf32> to vector<256x1xf32>
    %c0_15 = arith.constant 0 : index
    %c0_16 = arith.constant 0 : index
    %23 = vector.load %arg7[%c0_15, %c0_16] : memref<1x1xf32, #tpu.memory_space<vmem>>, vector<1x1xf32>
    %24 = vector.broadcast %23 : vector<1x1xf32> to vector<256x1xf32>
    %25 = arith.addf %22, %24 : vector<256x1xf32>
    %c0_17 = arith.constant 0 : index
    %c0_18 = arith.constant 0 : index
    %26 = vector.load %arg8[%c0_17, %c0_18] : memref<256x1xf32, #tpu.memory_space<vmem>>, vector<256x1xf32>
    tpu.vector_store %arg8[%c0_17, %c0_18], %25 {strides = array<i32>} : memref<256x1xf32, #tpu.memory_space<vmem>>, vector<256x1xf32>,
    return
  }
  func.func @transform_0(%arg0: i32) -> (i32, i32) {
    %c0_i32 = arith.constant 0 : i32
    %c0_i32_0 = arith.constant 0 : i32
    return %arg0, %c0_i32 : i32, i32
  }
  func.func @transform_1(%arg0: i32) -> (i32, i32) {
    %c0_i32 = arith.constant 0 : i32
    %c0_i32_0 = arith.constant 0 : i32
    %c0_i32_1 = arith.constant 0 : i32
    return %c0_i32, %c0_i32_0 : i32, i32
  }
  func.func @transform_2(%arg0: i32) -> (i32, i32) {
    %c0_i32 = arith.constant 0 : i32
    %c0_i32_0 = arith.constant 0 : i32
    %c0_i32_1 = arith.constant 0 : i32
    return %c0_i32, %c0_i32_0 : i32, i32
  }
  func.func @transform_3(%arg0: i32) -> (i32, i32) {
    %c0_i32 = arith.constant 0 : i32
    %c0_i32_0 = arith.constant 0 : i32
    %c0_i32_1 = arith.constant 0 : i32
    return %c0_i32, %c0_i32_0 : i32, i32
  }
  func.func @transform_4(%arg0: i32) -> (i32, i32) {
    %c0_i32 = arith.constant 0 : i32
    %c0_i32_0 = arith.constant 0 : i32
    %c0_i32_1 = arith.constant 0 : i32
    return %c0_i32, %c0_i32_0 : i32, i32
  }
  func.func @transform_5(%arg0: i32) -> (i32, i32) {
    %c0_i32 = arith.constant 0 : i32
    %c0_i32_0 = arith.constant 0 : i32
    %c0_i32_1 = arith.constant 0 : i32
    return %c0_i32, %c0_i32_0 : i32, i32
  }
  func.func @transform_6(%arg0: i32) -> (i32, i32) {
    %c0_i32 = arith.constant 0 : i32
    %c0_i32_0 = arith.constant 0 : i32
    %c0_i32_1 = arith.constant 0 : i32
    return %c0_i32, %c0_i32_0 : i32, i32
  }
  func.func @transform_7(%arg0: i32) -> (i32, i32) {
    %c0_i32 = arith.constant 0 : i32
    %c0_i32_0 = arith.constant 0 : i32
    return %arg0, %c0_i32 : i32, i32
  }
}

</mosaic_0001>

<llo_original>
// kernel: tpu_custom_call.1
$region0: #{tpu_custom_call.1}
  #allocation0 [shape = 'u32[]', space=smem, size = 0x4, offset = 0x4, fixed_abs, tag = 'smem constant byte address 0x4 - core index']
  #allocation1 [shape = 'u32[72,128]{1,0:T(1,128)}', space=vmem, size = 0x9000, scoped, tag = 'internal scratch']
  #allocation2 [shape = 'f32[1,1]{1,0:T(1,128)S(1)}', space=vmem, size = 0x200, scoped, tag = 'scoped memory for tpu_custom_call.1']
  %s0 = inlined_call_operand.hbm [shape: f32[256,128], index: 0, kind: input, shape index: {}]
  %s1 = inlined_call_operand.hbm [shape: f32[128,512], index: 1, kind: input, shape index: {}]
  %s2 = inlined_call_operand.vmem [shape: f32[1,256], index: 2, kind: input, shape index: {}]
  %s3 = inlined_call_operand.hbm [shape: f32[256,256], index: 3, kind: input, shape index: {}]
  %s4 = inlined_call_operand.vmem [shape: f32[1,256], index: 4, kind: input, shape index: {}]
  %s5 = inlined_call_operand.vmem [shape: f32[1,256], index: 5, kind: input, shape index: {}]
  %s6 = inlined_call_operand.<no memory space> [shape: f32[1,1], index: 6, kind: input, shape index: {}]
  %s7 = inlined_call_operand.vmem [shape: f32[256,1], index: 7, kind: output, shape index: {}]
  %s8 = sld [smem:[#allocation0]]
  $region50: #{tpu_custom_call.1} parent=0
    _
  %s10 = ssub.s32 1, %s8
  %s11 = scalar_select 0, %s10, %s8
  %v12 = vstv %s6
  %13 = vst [vmem:[#allocation2] sm:$0x1] %v12
  $region1: #{tpu_custom_call.1} parent=0
    #allocation3 [shape = 'u8[131072]{0}', space=vmem, size = 0x20000, scoped, tag = 'input window, operand 0, single buffered']
    #allocation4 [shape = 's32[1]{0}', space=sflag, size = 0x4, scoped, tag = 'scoped memory for tpu_custom_call.1']
    #allocation5 [shape = 'u8[262144]{0}', space=vmem, size = 0x40000, scoped, tag = 'input window, operand 1, single buffered']
    #allocation6 [shape = 's32[1]{0}', space=sflag, size = 0x4, scoped, tag = 'scoped memory for tpu_custom_call.1']
    #allocation7 [shape = 'u8[262144]{0}', space=vmem, size = 0x40000, scoped, tag = 'input window, operand 3, single buffered']
    %14 = vsyncpa [#allocation4], 0
    %15 = vsyncpa [#allocation6], 0
    // Predicated region
    $region2: #{tpu_custom_call.1} parent=1 // pred_check
      _
    $region3: #{tpu_custom_call.1} parent=1 // pred_check_branch
      %17 = sbr.rel (0) target = $region5
    $region4: #{tpu_custom_call.1} parent=1 // pred_region
      %19 = vsyncadd [#allocation4], 0
      %s20 = sshll.u32 %s0, 4
      %s21 = int_to_ptr.hbm [resolvable:$true] %s20
      %s22 = sshll.u32 [#allocation3], 4
      %s23 = int_to_ptr.vmem [resolvable:$true] %s22
      %28 = dma.hbm_to_vmem [thread:$0]  %s21, 4096, %s23, [#allocation4], 128, 128, 8
    $region5: #{tpu_custom_call.1} parent=1 // pred_fallthru
      _
    // Predicated region
    $region6: #{tpu_custom_call.1} parent=1 // pred_check
      _
    $region7: #{tpu_custom_call.1} parent=1 // pred_check_branch
      %30 = sbr.rel (0) target = $region9
    $region8: #{tpu_custom_call.1} parent=1 // pred_region
      %32 = vsyncadd [#allocation6], 0
      %s33 = sshll.u32 %s1, 4
      %s34 = int_to_ptr.hbm [resolvable:$true] %s33
      %s35 = sshll.u32 [#allocation5], 4
      %s36 = int_to_ptr.vmem [resolvable:$true] %s35
      %41 = dma.hbm_to_vmem [thread:$0]  %s34, 8192, %s36, [#allocation6], 512, 512, 32
    $region9: #{tpu_custom_call.1} parent=1 // pred_fallthru
      _
    // Predicated region
    $region10: #{tpu_custom_call.1} parent=1 // pred_check
      _
    $region11: #{tpu_custom_call.1} parent=1 // pred_check_branch
      %43 = sbr.rel (0) target = $region13
    $region12: #{tpu_custom_call.1} parent=1 // pred_region
      _
    $region13: #{tpu_custom_call.1} parent=1 // pred_fallthru
      _
    // Predicated region
    $region14: #{tpu_custom_call.1} parent=1 // pred_check
      _
    $region15: #{tpu_custom_call.1} parent=1 // pred_check_branch
      %45 = sbr.rel (0) target = $region17
    $region16: #{tpu_custom_call.1} parent=1 // pred_region
      %47 = vsyncadd [#allocation6], 0
      %s48 = sshll.u32 %s3, 4
      %s49 = int_to_ptr.hbm [resolvable:$true] %s48
      %s50 = sshll.u32 [#allocation7], 4
      %s51 = int_to_ptr.vmem [resolvable:$true] %s50
      %56 = dma.hbm_to_vmem [thread:$0]  %s49, 8192, %s51, [#allocation6], 256, 256, 16
    $region17: #{tpu_custom_call.1} parent=1 // pred_fallthru
      _
    // Predicated region
    $region18: #{tpu_custom_call.1} parent=1 // pred_check
      _
    $region19: #{tpu_custom_call.1} parent=1 // pred_check_branch
      %58 = sbr.rel (0) target = $region21
    $region20: #{tpu_custom_call.1} parent=1 // pred_region
      _
    $region21: #{tpu_custom_call.1} parent=1 // pred_fallthru
      _
    // Predicated region
    $region22: #{tpu_custom_call.1} parent=1 // pred_check
      _
    $region23: #{tpu_custom_call.1} parent=1 // pred_check_branch
      %60 = sbr.rel (0) target = $region25
    $region24: #{tpu_custom_call.1} parent=1 // pred_region
      _
    $region25: #{tpu_custom_call.1} parent=1 // pred_fallthru
      _
    // Predicated region
    $region26: #{tpu_custom_call.1} parent=1 // pred_check
      _
    $region27: #{tpu_custom_call.1} parent=1 // pred_check_branch
      %62 = sbr.rel (0) target = $region29
    $region28: #{tpu_custom_call.1} parent=1 // pred_region
      _
    $region29: #{tpu_custom_call.1} parent=1 // pred_fallthru
      _
    // Predicated region
    $region30: #{tpu_custom_call.1} parent=1 // pred_check
      _
    $region31: #{tpu_custom_call.1} parent=1 // pred_check_branch
      %64 = sbr.rel (0) target = $region33
    $region32: #{tpu_custom_call.1} parent=1 // pred_region
      %66 = dma.done [#allocation4], 4096
    $region33: #{tpu_custom_call.1} parent=1 // pred_fallthru
      _
    // Predicated region
    $region34: #{tpu_custom_call.1} parent=1 // pred_check
      _
    $region35: #{tpu_custom_call.1} parent=1 // pred_check_branch
      %68 = sbr.rel (0) target = $region37
    $region36: #{tpu_custom_call.1} parent=1 // pred_region
      %70 = dma.done [#allocation6], 8192
    $region37: #{tpu_custom_call.1} parent=1 // pred_fallthru
      _
    // Predicated region
    $region38: #{tpu_custom_call.1} parent=1 // pred_check
      _
    $region39: #{tpu_custom_call.1} parent=1 // pred_check_branch
      %72 = sbr.rel (0) target = $region41
    $region40: #{tpu_custom_call.1} parent=1 // pred_region
      %74 = dma.done [#allocation6], 8192
    $region41: #{tpu_custom_call.1} parent=1 // pred_fallthru
      _
    %v75 = vld [vmem:[#allocation3] sm:$0xff]
    %v76 = vld [vmem:[#allocation3 + $0x8] sm:$0xff]
    %v77 = vld [vmem:[#allocation3 + $0x10] sm:$0xff]
    %v78 = vld [vmem:[#allocation3 + $0x18] sm:$0xff]
    %v79 = vld [vmem:[#allocation3 + $0x20] sm:$0xff]
    %v80 = vld [vmem:[#allocation3 + $0x28] sm:$0xff]
    %v81 = vld [vmem:[#allocation3 + $0x30] sm:$0xff]
    %v82 = vld [vmem:[#allocation3 + $0x38] sm:$0xff]
    %v83 = vld [vmem:[#allocation3 + $0x40] sm:$0xff]
    %v84 = vld [vmem:[#allocation3 + $0x48] sm:$0xff]
    %v85 = vld [vmem:[#allocation3 + $0x50] sm:$0xff]
    %v86 = vld [vmem:[#allocation3 + $0x58] sm:$0xff]
    %v87 = vld [vmem:[#allocation3 + $0x60] sm:$0xff]
    %v88 = vld [vmem:[#allocation3 + $0x68] sm:$0xff]
    %v89 = vld [vmem:[#allocation3 + $0x70] sm:$0xff]
    %v90 = vld [vmem:[#allocation3 + $0x78] sm:$0xff]
    %v91 = vld [vmem:[#allocation3 + $0x80] sm:$0xff]
    %v92 = vld [vmem:[#allocation3 + $0x88] sm:$0xff]
    %v93 = vld [vmem:[#allocation3 + $0x90] sm:$0xff]
    %v94 = vld [vmem:[#allocation3 + $0x98] sm:$0xff]
    %v95 = vld [vmem:[#allocation3 + $0xa0] sm:$0xff]
    %v96 = vld [vmem:[#allocation3 + $0xa8] sm:$0xff]
    %v97 = vld [vmem:[#allocation3 + $0xb0] sm:$0xff]
    %v98 = vld [vmem:[#allocation3 + $0xb8] sm:$0xff]
    %v99 = vld [vmem:[#allocation3 + $0xc0] sm:$0xff]
    %v100 = vld [vmem:[#allocation3 + $0xc8] sm:$0xff]
    %v101 = vld [vmem:[#allocation3 + $0xd0] sm:$0xff]
    %v102 = vld [vmem:[#allocation3 + $0xd8] sm:$0xff]
    %v103 = vld [vmem:[#allocation3 + $0xe0] sm:$0xff]
    %v104 = vld [vmem:[#allocation3 + $0xe8] sm:$0xff]
    %v105 = vld [vmem:[#allocation3 + $0xf0] sm:$0xff]
    %v106 = vld [vmem:[#allocation3 + $0xf8] sm:$0xff]
    %v107 = vld [vmem:[#allocation5] sm:$0xff]
    %v108 = vld [vmem:[#allocation5 + $0x8] sm:$0xff]
    %v109 = vld [vmem:[#allocation5 + $0x10] sm:$0xff]
    %v110 = vld [vmem:[#allocation5 + $0x18] sm:$0xff]
    %v111 = vld [vmem:[#allocation5 + $0x20] sm:$0xff]
    %v112 = vld [vmem:[#allocation5 + $0x28] sm:$0xff]
    %v113 = vld [vmem:[#allocation5 + $0x30] sm:$0xff]
    %v114 = vld [vmem:[#allocation5 + $0x38] sm:$0xff]
    %v115 = vld [vmem:[#allocation5 + $0x40] sm:$0xff]
    %v116 = vld [vmem:[#allocation5 + $0x48] sm:$0xff]
    %v117 = vld [vmem:[#allocation5 + $0x50] sm:$0xff]
    %v118 = vld [vmem:[#allocation5 + $0x58] sm:$0xff]
    %v119 = vld [vmem:[#allocation5 + $0x60] sm:$0xff]
    %v120 = vld [vmem:[#allocation5 + $0x68] sm:$0xff]
    %v121 = vld [vmem:[#allocation5 + $0x70] sm:$0xff]
    %v122 = vld [vmem:[#allocation5 + $0x78] sm:$0xff]
    %v123 = vld [vmem:[#allocation5 + $0x80] sm:$0xff]
    %v124 = vld [vmem:[#allocation5 + $0x88] sm:$0xff]
    %v125 = vld [vmem:[#allocation5 + $0x90] sm:$0xff]
    %v126 = vld [vmem:[#allocation5 + $0x98] sm:$0xff]
    %v127 = vld [vmem:[#allocation5 + $0xa0] sm:$0xff]
    %v128 = vld [vmem:[#allocation5 + $0xa8] sm:$0xff]
    %v129 = vld [vmem:[#allocation5 + $0xb0] sm:$0xff]
    %v130 = vld [vmem:[#allocation5 + $0xb8] sm:$0xff]
    %v131 = vld [vmem:[#allocation5 + $0xc0] sm:$0xff]
    %v132 = vld [vmem:[#allocation5 + $0xc8] sm:$0xff]
    %v133 = vld [vmem:[#allocation5 + $0xd0] sm:$0xff]
    %v134 = vld [vmem:[#allocation5 + $0xd8] sm:$0xff]
    %v135 = vld [vmem:[#allocation5 + $0xe0] sm:$0xff]
    %v136 = vld [vmem:[#allocation5 + $0xe8] sm:$0xff]
    %v137 = vld [vmem:[#allocation5 + $0xf0] sm:$0xff]
    %v138 = vld [vmem:[#allocation5 + $0xf8] sm:$0xff]
    %v139 = vld [vmem:[#allocation5 + $0x100] sm:$0xff]
    %v140 = vld [vmem:[#allocation5 + $0x108] sm:$0xff]
    %v141 = vld [vmem:[#allocation5 + $0x110] sm:$0xff]
    %v142 = vld [vmem:[#allocation5 + $0x118] sm:$0xff]
    %v143 = vld [vmem:[#allocation5 + $0x120] sm:$0xff]
    %v144 = vld [vmem:[#allocation5 + $0x128] sm:$0xff]
    %v145 = vld [vmem:[#allocation5 + $0x130] sm:$0xff]
    %v146 = vld [vmem:[#allocation5 + $0x138] sm:$0xff]
    %v147 = vld [vmem:[#allocation5 + $0x140] sm:$0xff]
    %v148 = vld [vmem:[#allocation5 + $0x148] sm:$0xff]
    %v149 = vld [vmem:[#allocation5 + $0x150] sm:$0xff]
    %v150 = vld [vmem:[#allocation5 + $0x158] sm:$0xff]
    %v151 = vld [vmem:[#allocation5 + $0x160] sm:$0xff]
    %v152 = vld [vmem:[#allocation5 + $0x168] sm:$0xff]
    %v153 = vld [vmem:[#allocation5 + $0x170] sm:$0xff]
    %v154 = vld [vmem:[#allocation5 + $0x178] sm:$0xff]
    %v155 = vld [vmem:[#allocation5 + $0x180] sm:$0xff]
    %v156 = vld [vmem:[#allocation5 + $0x188] sm:$0xff]
    %v157 = vld [vmem:[#allocation5 + $0x190] sm:$0xff]
    %v158 = vld [vmem:[#allocation5 + $0x198] sm:$0xff]
    %v159 = vld [vmem:[#allocation5 + $0x1a0] sm:$0xff]
    %v160 = vld [vmem:[#allocation5 + $0x1a8] sm:$0xff]
    %v161 = vld [vmem:[#allocation5 + $0x1b0] sm:$0xff]
    %v162 = vld [vmem:[#allocation5 + $0x1b8] sm:$0xff]
    %v163 = vld [vmem:[#allocation5 + $0x1c0] sm:$0xff]
    %v164 = vld [vmem:[#allocation5 + $0x1c8] sm:$0xff]
    %v165 = vld [vmem:[#allocation5 + $0x1d0] sm:$0xff]
    %v166 = vld [vmem:[#allocation5 + $0x1d8] sm:$0xff]
    %v167 = vld [vmem:[#allocation5 + $0x1e0] sm:$0xff]
    %v168 = vld [vmem:[#allocation5 + $0x1e8] sm:$0xff]
    %v169 = vld [vmem:[#allocation5 + $0x1f0] sm:$0xff]
    %v170 = vld [vmem:[#allocation5 + $0x1f8] sm:$0xff]
    %171 = vmatpush.msra.mxu0 %v167
    %172 = vmatpush.msra.mxu0 %v163
    %173 = vmatpush.msra.mxu0 %v159
    %174 = vmatpush.msra.mxu0 %v155
    %175 = vmatpush.msra.mxu0 %v151
    %176 = vmatpush.msra.mxu0 %v147
    %177 = vmatpush.msra.mxu0 %v143
    %178 = vmatpush.msra.mxu0 %v139
    %179 = vmatpush.msra.mxu0 %v135
    %180 = vmatpush.msra.mxu0 %v131
    %181 = vmatpush.msra.mxu0 %v127
    %182 = vmatpush.msra.mxu0 %v123
    %183 = vmatpush.msra.mxu0 %v119
    %184 = vmatpush.msra.mxu0 %v115
    %185 = vmatpush.msra.mxu0 %v111
    %186 = vmatpush.msra.mxu0 %v107
    %187 = vmatmul.f32.gmra.mxu0 %v75
    %v188 = vpop.f32.mrf.mxu0
    %v189 = vadd.f32 0.0, %v188
    %190 = vmatmul.f32.gmra.mxu0 %v76
    %v191 = vpop.f32.mrf.mxu0
    %v192 = vadd.f32 0.0, %v191
    %193 = vmatmul.f32.gmra.mxu0 %v77
    %v194 = vpop.f32.mrf.mxu0
    %v195 = vadd.f32 0.0, %v194
    %196 = vmatmul.f32.gmra.mxu0 %v78
    %v197 = vpop.f32.mrf.mxu0
    %v198 = vadd.f32 0.0, %v197
    %199 = vmatmul.f32.gmra.mxu0 %v79
    %v200 = vpop.f32.mrf.mxu0
    %v201 = vadd.f32 0.0, %v200
    %202 = vmatmul.f32.gmra.mxu0 %v80
    %v203 = vpop.f32.mrf.mxu0
    %v204 = vadd.f32 0.0, %v203
    %205 = vmatmul.f32.gmra.mxu0 %v81
    %v206 = vpop.f32.mrf.mxu0
    %v207 = vadd.f32 0.0, %v206
    %208 = vmatmul.f32.gmra.mxu0 %v82
    %v209 = vpop.f32.mrf.mxu0
    %v210 = vadd.f32 0.0, %v209
    %211 = vmatmul.f32.gmra.mxu0 %v83
    %v212 = vpop.f32.mrf.mxu0
    %v213 = vadd.f32 0.0, %v212
    %214 = vmatmul.f32.gmra.mxu0 %v84
    %v215 = vpop.f32.mrf.mxu0
    %v216 = vadd.f32 0.0, %v215
    %217 = vmatmul.f32.gmra.mxu0 %v85
    %v218 = vpop.f32.mrf.mxu0
    %v219 = vadd.f32 0.0, %v218
    %220 = vmatmul.f32.gmra.mxu0 %v86
    %v221 = vpop.f32.mrf.mxu0
    %v222 = vadd.f32 0.0, %v221
    %223 = vmatmul.f32.gmra.mxu0 %v87
    %v224 = vpop.f32.mrf.mxu0
    %v225 = vadd.f32 0.0, %v224
    %226 = vmatmul.f32.gmra.mxu0 %v88
    %v227 = vpop.f32.mrf.mxu0
    %v228 = vadd.f32 0.0, %v227
    %229 = vmatmul.f32.gmra.mxu0 %v89
    %v230 = vpop.f32.mrf.mxu0
    %v231 = vadd.f32 0.0, %v230
    %232 = vmatmul.f32.gmra.mxu0 %v90
    %v233 = vpop.f32.mrf.mxu0
    %v234 = vadd.f32 0.0, %v233
    %235 = vmatmul.f32.gmra.mxu0 %v91
    %v236 = vpop.f32.mrf.mxu0
    %v237 = vadd.f32 0.0, %v236
    %238 = vmatmul.f32.gmra.mxu0 %v92
    %v239 = vpop.f32.mrf.mxu0
    %v240 = vadd.f32 0.0, %v239
    %241 = vmatmul.f32.gmra.mxu0 %v93
    %v242 = vpop.f32.mrf.mxu0
    %v243 = vadd.f32 0.0, %v242
    %244 = vmatmul.f32.gmra.mxu0 %v94
    %v245 = vpop.f32.mrf.mxu0
    %v246 = vadd.f32 0.0, %v245
    %247 = vmatmul.f32.gmra.mxu0 %v95
    %v248 = vpop.f32.mrf.mxu0
    %v249 = vadd.f32 0.0, %v248
    %250 = vmatmul.f32.gmra.mxu0 %v96
    %v251 = vpop.f32.mrf.mxu0
    %v252 = vadd.f32 0.0, %v251
    %253 = vmatmul.f32.gmra.mxu0 %v97
    %v254 = vpop.f32.mrf.mxu0
    %v255 = vadd.f32 0.0, %v254
    %256 = vmatmul.f32.gmra.mxu0 %v98
    %v257 = vpop.f32.mrf.mxu0
    %v258 = vadd.f32 0.0, %v257
    %259 = vmatmul.f32.gmra.mxu0 %v99
    %v260 = vpop.f32.mrf.mxu0
    %v261 = vadd.f32 0.0, %v260
    %262 = vmatmul.f32.gmra.mxu0 %v100
    %v263 = vpop.f32.mrf.mxu0
    %v264 = vadd.f32 0.0, %v263
    %265 = vmatmul.f32.gmra.mxu0 %v101
    %v266 = vpop.f32.mrf.mxu0
    %v267 = vadd.f32 0.0, %v266
    %268 = vmatmul.f32.gmra.mxu0 %v102
    %v269 = vpop.f32.mrf.mxu0
    %v270 = vadd.f32 0.0, %v269
    %271 = vmatmul.f32.gmra.mxu0 %v103
    %v272 = vpop.f32.mrf.mxu0
    %v273 = vadd.f32 0.0, %v272
    %274 = vmatmul.f32.gmra.mxu0 %v104
    %v275 = vpop.f32.mrf.mxu0
    %v276 = vadd.f32 0.0, %v275
    %277 = vmatmul.f32.gmra.mxu0 %v105
    %v278 = vpop.f32.mrf.mxu0
    %v279 = vadd.f32 0.0, %v278
    %280 = vmatmul.f32.gmra.mxu0 %v106
    %v281 = vpop.f32.mrf.mxu0
    %v282 = vadd.f32 0.0, %v281
    %283 = vdwg.mxu0
    %284 = vmatpush.msra.mxu0 %v168
    %285 = vmatpush.msra.mxu0 %v164
    %286 = vmatpush.msra.mxu0 %v160
    %287 = vmatpush.msra.mxu0 %v156
    %288 = vmatpush.msra.mxu0 %v152
    %289 = vmatpush.msra.mxu0 %v148
    %290 = vmatpush.msra.mxu0 %v144
    %291 = vmatpush.msra.mxu0 %v140
    %292 = vmatpush.msra.mxu0 %v136
    %293 = vmatpush.msra.mxu0 %v132
    %294 = vmatpush.msra.mxu0 %v128
    %295 = vmatpush.msra.mxu0 %v124
    %296 = vmatpush.msra.mxu0 %v120
    %297 = vmatpush.msra.mxu0 %v116
    %298 = vmatpush.msra.mxu0 %v112
    %299 = vmatpush.msra.mxu0 %v108
    %300 = vmatmul.f32.gmra.mxu0 %v75
    %v301 = vpop.f32.mrf.mxu0
    %v302 = vadd.f32 0.0, %v301
    %303 = vmatmul.f32.gmra.mxu0 %v76
    %v304 = vpop.f32.mrf.mxu0
    %v305 = vadd.f32 0.0, %v304
    %306 = vmatmul.f32.gmra.mxu0 %v77
    %v307 = vpop.f32.mrf.mxu0
    %v308 = vadd.f32 0.0, %v307
    %309 = vmatmul.f32.gmra.mxu0 %v78
    %v310 = vpop.f32.mrf.mxu0
    %v311 = vadd.f32 0.0, %v310
    %312 = vmatmul.f32.gmra.mxu0 %v79
    %v313 = vpop.f32.mrf.mxu0
    %v314 = vadd.f32 0.0, %v313
    %315 = vmatmul.f32.gmra.mxu0 %v80
    %v316 = vpop.f32.mrf.mxu0
    %v317 = vadd.f32 0.0, %v316
    %318 = vmatmul.f32.gmra.mxu0 %v81
    %v319 = vpop.f32.mrf.mxu0
    %v320 = vadd.f32 0.0, %v319
    %321 = vmatmul.f32.gmra.mxu0 %v82
    %v322 = vpop.f32.mrf.mxu0
    %v323 = vadd.f32 0.0, %v322
    %324 = vmatmul.f32.gmra.mxu0 %v83
    %v325 = vpop.f32.mrf.mxu0
    %v326 = vadd.f32 0.0, %v325
    %327 = vmatmul.f32.gmra.mxu0 %v84
    %v328 = vpop.f32.mrf.mxu0
    %v329 = vadd.f32 0.0, %v328
    %330 = vmatmul.f32.gmra.mxu0 %v85
    %v331 = vpop.f32.mrf.mxu0
    %v332 = vadd.f32 0.0, %v331
    %333 = vmatmul.f32.gmra.mxu0 %v86
    %v334 = vpop.f32.mrf.mxu0
    %v335 = vadd.f32 0.0, %v334
    %336 = vmatmul.f32.gmra.mxu0 %v87
    %v337 = vpop.f32.mrf.mxu0
    %v338 = vadd.f32 0.0, %v337
    %339 = vmatmul.f32.gmra.mxu0 %v88
    %v340 = vpop.f32.mrf.mxu0
    %v341 = vadd.f32 0.0, %v340
    %342 = vmatmul.f32.gmra.mxu0 %v89
    %v343 = vpop.f32.mrf.mxu0
    %v344 = vadd.f32 0.0, %v343
    %345 = vmatmul.f32.gmra.mxu0 %v90
    %v346 = vpop.f32.mrf.mxu0
    %v347 = vadd.f32 0.0, %v346
    %348 = vmatmul.f32.gmra.mxu0 %v91
    %v349 = vpop.f32.mrf.mxu0
    %v350 = vadd.f32 0.0, %v349
    %351 = vmatmul.f32.gmra.mxu0 %v92
    %v352 = vpop.f32.mrf.mxu0
    %v353 = vadd.f32 0.0, %v352
    %354 = vmatmul.f32.gmra.mxu0 %v93
    %v355 = vpop.f32.mrf.mxu0
    %v356 = vadd.f32 0.0, %v355
    %357 = vmatmul.f32.gmra.mxu0 %v94
    %v358 = vpop.f32.mrf.mxu0
    %v359 = vadd.f32 0.0, %v358
    %360 = vmatmul.f32.gmra.mxu0 %v95
    %v361 = vpop.f32.mrf.mxu0
    %v362 = vadd.f32 0.0, %v361
    %363 = vmatmul.f32.gmra.mxu0 %v96
    %v364 = vpop.f32.mrf.mxu0
    %v365 = vadd.f32 0.0, %v364
    %366 = vmatmul.f32.gmra.mxu0 %v97
    %v367 = vpop.f32.mrf.mxu0
    %v368 = vadd.f32 0.0, %v367
    %369 = vmatmul.f32.gmra.mxu0 %v98
    %v370 = vpop.f32.mrf.mxu0
    %v371 = vadd.f32 0.0, %v370
    %372 = vmatmul.f32.gmra.mxu0 %v99
    %v373 = vpop.f32.mrf.mxu0
    %v374 = vadd.f32 0.0, %v373
    %375 = vmatmul.f32.gmra.mxu0 %v100
    %v376 = vpop.f32.mrf.mxu0
    %v377 = vadd.f32 0.0, %v376
    %378 = vmatmul.f32.gmra.mxu0 %v101
    %v379 = vpop.f32.mrf.mxu0
    %v380 = vadd.f32 0.0, %v379
    %381 = vmatmul.f32.gmra.mxu0 %v102
    %v382 = vpop.f32.mrf.mxu0
    %v383 = vadd.f32 0.0, %v382
    %384 = vmatmul.f32.gmra.mxu0 %v103
    %v385 = vpop.f32.mrf.mxu0
    %v386 = vadd.f32 0.0, %v385
    %387 = vmatmul.f32.gmra.mxu0 %v104
    %v388 = vpop.f32.mrf.mxu0
    %v389 = vadd.f32 0.0, %v388
    %390 = vmatmul.f32.gmra.mxu0 %v105
    %v391 = vpop.f32.mrf.mxu0
    %v392 = vadd.f32 0.0, %v391
    %393 = vmatmul.f32.gmra.mxu0 %v106
    %v394 = vpop.f32.mrf.mxu0
    %v395 = vadd.f32 0.0, %v394
    %396 = vdwg.mxu0
    %397 = vmatpush.msra.mxu0 %v169
    %398 = vmatpush.msra.mxu0 %v165
    %399 = vmatpush.msra.mxu0 %v161
    %400 = vmatpush.msra.mxu0 %v157
    %401 = vmatpush.msra.mxu0 %v153
    %402 = vmatpush.msra.mxu0 %v149
    %403 = vmatpush.msra.mxu0 %v145
    %404 = vmatpush.msra.mxu0 %v141
    %405 = vmatpush.msra.mxu0 %v137
    %406 = vmatpush.msra.mxu0 %v133
    %407 = vmatpush.msra.mxu0 %v129
    %408 = vmatpush.msra.mxu0 %v125
    %409 = vmatpush.msra.mxu0 %v121
    %410 = vmatpush.msra.mxu0 %v117
    %411 = vmatpush.msra.mxu0 %v113
    %412 = vmatpush.msra.mxu0 %v109
    %413 = vmatmul.f32.gmra.mxu0 %v75
    %v414 = vpop.f32.mrf.mxu0
    %v415 = vadd.f32 0.0, %v414
    %416 = vmatmul.f32.gmra.mxu0 %v76
    %v417 = vpop.f32.mrf.mxu0
    %v418 = vadd.f32 0.0, %v417
    %419 = vmatmul.f32.gmra.mxu0 %v77
    %v420 = vpop.f32.mrf.mxu0
    %v421 = vadd.f32 0.0, %v420
    %422 = vmatmul.f32.gmra.mxu0 %v78
    %v423 = vpop.f32.mrf.mxu0
    %v424 = vadd.f32 0.0, %v423
    %425 = vmatmul.f32.gmra.mxu0 %v79
    %v426 = vpop.f32.mrf.mxu0
    %v427 = vadd.f32 0.0, %v426
    %428 = vmatmul.f32.gmra.mxu0 %v80
    %v429 = vpop.f32.mrf.mxu0
    %v430 = vadd.f32 0.0, %v429
    %431 = vmatmul.f32.gmra.mxu0 %v81
    %v432 = vpop.f32.mrf.mxu0
    %v433 = vadd.f32 0.0, %v432
    %434 = vmatmul.f32.gmra.mxu0 %v82
    %v435 = vpop.f32.mrf.mxu0
    %v436 = vadd.f32 0.0, %v435
    %437 = vmatmul.f32.gmra.mxu0 %v83
    %v438 = vpop.f32.mrf.mxu0
    %v439 = vadd.f32 0.0, %v438
    %440 = vmatmul.f32.gmra.mxu0 %v84
    %v441 = vpop.f32.mrf.mxu0
    %v442 = vadd.f32 0.0, %v441
    %443 = vmatmul.f32.gmra.mxu0 %v85
    %v444 = vpop.f32.mrf.mxu0
    %v445 = vadd.f32 0.0, %v444
    %446 = vmatmul.f32.gmra.mxu0 %v86
    %v447 = vpop.f32.mrf.mxu0
    %v448 = vadd.f32 0.0, %v447
    %449 = vmatmul.f32.gmra.mxu0 %v87
    %v450 = vpop.f32.mrf.mxu0
    %v451 = vadd.f32 0.0, %v450
    %452 = vmatmul.f32.gmra.mxu0 %v88
    %v453 = vpop.f32.mrf.mxu0
    %v454 = vadd.f32 0.0, %v453
    %455 = vmatmul.f32.gmra.mxu0 %v89
    %v456 = vpop.f32.mrf.mxu0
    %v457 = vadd.f32 0.0, %v456
    %458 = vmatmul.f32.gmra.mxu0 %v90
    %v459 = vpop.f32.mrf.mxu0
    %v460 = vadd.f32 0.0, %v459
    %461 = vmatmul.f32.gmra.mxu0 %v91
    %v462 = vpop.f32.mrf.mxu0
    %v463 = vadd.f32 0.0, %v462
    %464 = vmatmul.f32.gmra.mxu0 %v92
    %v465 = vpop.f32.mrf.mxu0
    %v466 = vadd.f32 0.0, %v465
    %467 = vmatmul.f32.gmra.mxu0 %v93
    %v468 = vpop.f32.mrf.mxu0
    %v469 = vadd.f32 0.0, %v468
    %470 = vmatmul.f32.gmra.mxu0 %v94
    %v471 = vpop.f32.mrf.mxu0
    %v472 = vadd.f32 0.0, %v471
    %473 = vmatmul.f32.gmra.mxu0 %v95
    %v474 = vpop.f32.mrf.mxu0
    %v475 = vadd.f32 0.0, %v474
    %476 = vmatmul.f32.gmra.mxu0 %v96
    %v477 = vpop.f32.mrf.mxu0
    %v478 = vadd.f32 0.0, %v477
    %479 = vmatmul.f32.gmra.mxu0 %v97
    %v480 = vpop.f32.mrf.mxu0
    %v481 = vadd.f32 0.0, %v480
    %482 = vmatmul.f32.gmra.mxu0 %v98
    %v483 = vpop.f32.mrf.mxu0
    %v484 = vadd.f32 0.0, %v483
    %485 = vmatmul.f32.gmra.mxu0 %v99
    %v486 = vpop.f32.mrf.mxu0
    %v487 = vadd.f32 0.0, %v486
    %488 = vmatmul.f32.gmra.mxu0 %v100
    %v489 = vpop.f32.mrf.mxu0
    %v490 = vadd.f32 0.0, %v489
    %491 = vmatmul.f32.gmra.mxu0 %v101
    %v492 = vpop.f32.mrf.mxu0
    %v493 = vadd.f32 0.0, %v492
    %494 = vmatmul.f32.gmra.mxu0 %v102
    %v495 = vpop.f32.mrf.mxu0
    %v496 = vadd.f32 0.0, %v495
    %497 = vmatmul.f32.gmra.mxu0 %v103
    %v498 = vpop.f32.mrf.mxu0
    %v499 = vadd.f32 0.0, %v498
    %500 = vmatmul.f32.gmra.mxu0 %v104
    %v501 = vpop.f32.mrf.mxu0
    %v502 = vadd.f32 0.0, %v501
    %503 = vmatmul.f32.gmra.mxu0 %v105
    %v504 = vpop.f32.mrf.mxu0
    %v505 = vadd.f32 0.0, %v504
    %506 = vmatmul.f32.gmra.mxu0 %v106
    %v507 = vpop.f32.mrf.mxu0
    %v508 = vadd.f32 0.0, %v507
    %509 = vdwg.mxu0
    %510 = vmatpush.msra.mxu0 %v170
    %511 = vmatpush.msra.mxu0 %v166
    %512 = vmatpush.msra.mxu0 %v162
    %513 = vmatpush.msra.mxu0 %v158
    %514 = vmatpush.msra.mxu0 %v154
    %515 = vmatpush.msra.mxu0 %v150
    %516 = vmatpush.msra.mxu0 %v146
    %517 = vmatpush.msra.mxu0 %v142
    %518 = vmatpush.msra.mxu0 %v138
    %519 = vmatpush.msra.mxu0 %v134
    %520 = vmatpush.msra.mxu0 %v130
    %521 = vmatpush.msra.mxu0 %v126
    %522 = vmatpush.msra.mxu0 %v122
    %523 = vmatpush.msra.mxu0 %v118
    %524 = vmatpush.msra.mxu0 %v114
    %525 = vmatpush.msra.mxu0 %v110
    %526 = vmatmul.f32.gmra.mxu0 %v75
    %v527 = vpop.f32.mrf.mxu0
    %v528 = vadd.f32 0.0, %v527
    %529 = vmatmul.f32.gmra.mxu0 %v76
    %v530 = vpop.f32.mrf.mxu0
    %v531 = vadd.f32 0.0, %v530
    %532 = vmatmul.f32.gmra.mxu0 %v77
    %v533 = vpop.f32.mrf.mxu0
    %v534 = vadd.f32 0.0, %v533
    %535 = vmatmul.f32.gmra.mxu0 %v78
    %v536 = vpop.f32.mrf.mxu0
    %v537 = vadd.f32 0.0, %v536
    %538 = vmatmul.f32.gmra.mxu0 %v79
    %v539 = vpop.f32.mrf.mxu0
    %v540 = vadd.f32 0.0, %v539
    %541 = vmatmul.f32.gmra.mxu0 %v80
    %v542 = vpop.f32.mrf.mxu0
    %v543 = vadd.f32 0.0, %v542
    %544 = vmatmul.f32.gmra.mxu0 %v81
    %v545 = vpop.f32.mrf.mxu0
    %v546 = vadd.f32 0.0, %v545
    %547 = vmatmul.f32.gmra.mxu0 %v82
    %v548 = vpop.f32.mrf.mxu0
    %v549 = vadd.f32 0.0, %v548
    %550 = vmatmul.f32.gmra.mxu0 %v83
    %v551 = vpop.f32.mrf.mxu0
    %v552 = vadd.f32 0.0, %v551
    %553 = vmatmul.f32.gmra.mxu0 %v84
    %v554 = vpop.f32.mrf.mxu0
    %v555 = vadd.f32 0.0, %v554
    %556 = vmatmul.f32.gmra.mxu0 %v85
    %v557 = vpop.f32.mrf.mxu0
    %v558 = vadd.f32 0.0, %v557
    %559 = vmatmul.f32.gmra.mxu0 %v86
    %v560 = vpop.f32.mrf.mxu0
    %v561 = vadd.f32 0.0, %v560
    %562 = vmatmul.f32.gmra.mxu0 %v87
    %v563 = vpop.f32.mrf.mxu0
    %v564 = vadd.f32 0.0, %v563
    %565 = vmatmul.f32.gmra.mxu0 %v88
    %v566 = vpop.f32.mrf.mxu0
    %v567 = vadd.f32 0.0, %v566
    %568 = vmatmul.f32.gmra.mxu0 %v89
    %v569 = vpop.f32.mrf.mxu0
    %v570 = vadd.f32 0.0, %v569
    %571 = vmatmul.f32.gmra.mxu0 %v90
    %v572 = vpop.f32.mrf.mxu0
    %v573 = vadd.f32 0.0, %v572
    %574 = vmatmul.f32.gmra.mxu0 %v91
    %v575 = vpop.f32.mrf.mxu0
    %v576 = vadd.f32 0.0, %v575
    %577 = vmatmul.f32.gmra.mxu0 %v92
    %v578 = vpop.f32.mrf.mxu0
    %v579 = vadd.f32 0.0, %v578
    %580 = vmatmul.f32.gmra.mxu0 %v93
    %v581 = vpop.f32.mrf.mxu0
    %v582 = vadd.f32 0.0, %v581
    %583 = vmatmul.f32.gmra.mxu0 %v94
    %v584 = vpop.f32.mrf.mxu0
    %v585 = vadd.f32 0.0, %v584
    %586 = vmatmul.f32.gmra.mxu0 %v95
    %v587 = vpop.f32.mrf.mxu0
    %v588 = vadd.f32 0.0, %v587
    %589 = vmatmul.f32.gmra.mxu0 %v96
    %v590 = vpop.f32.mrf.mxu0
    %v591 = vadd.f32 0.0, %v590
    %592 = vmatmul.f32.gmra.mxu0 %v97
    %v593 = vpop.f32.mrf.mxu0
    %v594 = vadd.f32 0.0, %v593
    %595 = vmatmul.f32.gmra.mxu0 %v98
    %v596 = vpop.f32.mrf.mxu0
    %v597 = vadd.f32 0.0, %v596
    %598 = vmatmul.f32.gmra.mxu0 %v99
    %v599 = vpop.f32.mrf.mxu0
    %v600 = vadd.f32 0.0, %v599
    %601 = vmatmul.f32.gmra.mxu0 %v100
    %v602 = vpop.f32.mrf.mxu0
    %v603 = vadd.f32 0.0, %v602
    %604 = vmatmul.f32.gmra.mxu0 %v101
    %v605 = vpop.f32.mrf.mxu0
    %v606 = vadd.f32 0.0, %v605
    %607 = vmatmul.f32.gmra.mxu0 %v102
    %v608 = vpop.f32.mrf.mxu0
    %v609 = vadd.f32 0.0, %v608
    %610 = vmatmul.f32.gmra.mxu0 %v103
    %v611 = vpop.f32.mrf.mxu0
    %v612 = vadd.f32 0.0, %v611
    %613 = vmatmul.f32.gmra.mxu0 %v104
    %v614 = vpop.f32.mrf.mxu0
    %v615 = vadd.f32 0.0, %v614
    %616 = vmatmul.f32.gmra.mxu0 %v105
    %v617 = vpop.f32.mrf.mxu0
    %v618 = vadd.f32 0.0, %v617
    %619 = vmatmul.f32.gmra.mxu0 %v106
    %v620 = vpop.f32.mrf.mxu0
    %v621 = vadd.f32 0.0, %v620
    %622 = vdwg.mxu0
    %v623 = vld [vmem:[%s2] sm:$0x3]
    %v625 = vperm.slane %v623, 0
    %v626 = vperm.slane %v623, 1
    %v629 = vadd.f32 %v189, %v625
    %v630 = vadd.f32 %v302, %v626
    %v631 = vadd.f32 %v192, %v625
    %v632 = vadd.f32 %v305, %v626
    %v633 = vadd.f32 %v195, %v625
    %v634 = vadd.f32 %v308, %v626
    %v635 = vadd.f32 %v198, %v625
    %v636 = vadd.f32 %v311, %v626
    %v637 = vadd.f32 %v201, %v625
    %v638 = vadd.f32 %v314, %v626
    %v639 = vadd.f32 %v204, %v625
    %v640 = vadd.f32 %v317, %v626
    %v641 = vadd.f32 %v207, %v625
    %v642 = vadd.f32 %v320, %v626
    %v643 = vadd.f32 %v210, %v625
    %v644 = vadd.f32 %v323, %v626
    %v645 = vadd.f32 %v213, %v625
    %v646 = vadd.f32 %v326, %v626
    %v647 = vadd.f32 %v216, %v625
    %v648 = vadd.f32 %v329, %v626
    %v649 = vadd.f32 %v219, %v625
    %v650 = vadd.f32 %v332, %v626
    %v651 = vadd.f32 %v222, %v625
    %v652 = vadd.f32 %v335, %v626
    %v653 = vadd.f32 %v225, %v625
    %v654 = vadd.f32 %v338, %v626
    %v655 = vadd.f32 %v228, %v625
    %v656 = vadd.f32 %v341, %v626
    %v657 = vadd.f32 %v231, %v625
    %v658 = vadd.f32 %v344, %v626
    %v659 = vadd.f32 %v234, %v625
    %v660 = vadd.f32 %v347, %v626
    %v661 = vadd.f32 %v237, %v625
    %v662 = vadd.f32 %v350, %v626
    %v663 = vadd.f32 %v240, %v625
    %v664 = vadd.f32 %v353, %v626
    %v665 = vadd.f32 %v243, %v625
    %v666 = vadd.f32 %v356, %v626
    %v667 = vadd.f32 %v246, %v625
    %v668 = vadd.f32 %v359, %v626
    %v669 = vadd.f32 %v249, %v625
    %v670 = vadd.f32 %v362, %v626
    %v671 = vadd.f32 %v252, %v625
    %v672 = vadd.f32 %v365, %v626
    %v673 = vadd.f32 %v255, %v625
    %v674 = vadd.f32 %v368, %v626
    %v675 = vadd.f32 %v258, %v625
    %v676 = vadd.f32 %v371, %v626
    %v677 = vadd.f32 %v261, %v625
    %v678 = vadd.f32 %v374, %v626
    %v679 = vadd.f32 %v264, %v625
    %v680 = vadd.f32 %v377, %v626
    %v681 = vadd.f32 %v267, %v625
    %v682 = vadd.f32 %v380, %v626
    %v683 = vadd.f32 %v270, %v625
    %v684 = vadd.f32 %v383, %v626
    %v685 = vadd.f32 %v273, %v625
    %v686 = vadd.f32 %v386, %v626
    %v687 = vadd.f32 %v276, %v625
    %v688 = vadd.f32 %v389, %v626
    %v689 = vadd.f32 %v279, %v625
    %v690 = vadd.f32 %v392, %v626
    %v691 = vadd.f32 %v282, %v625
    %v692 = vadd.f32 %v395, %v626
    %v693 = vmax.f32 %v629, 0.0
    %v694 = vmax.f32 %v630, 0.0
    %v695 = vmax.f32 %v631, 0.0
    %v696 = vmax.f32 %v632, 0.0
    %v697 = vmax.f32 %v633, 0.0
    %v698 = vmax.f32 %v634, 0.0
    %v699 = vmax.f32 %v635, 0.0
    %v700 = vmax.f32 %v636, 0.0
    %v701 = vmax.f32 %v637, 0.0
    %v702 = vmax.f32 %v638, 0.0
    %v703 = vmax.f32 %v639, 0.0
    %v704 = vmax.f32 %v640, 0.0
    %v705 = vmax.f32 %v641, 0.0
    %v706 = vmax.f32 %v642, 0.0
    %v707 = vmax.f32 %v643, 0.0
    %v708 = vmax.f32 %v644, 0.0
    %v709 = vmax.f32 %v645, 0.0
    %v710 = vmax.f32 %v646, 0.0
    %v711 = vmax.f32 %v647, 0.0
    %v712 = vmax.f32 %v648, 0.0
    %v713 = vmax.f32 %v649, 0.0
    %v714 = vmax.f32 %v650, 0.0
    %v715 = vmax.f32 %v651, 0.0
    %v716 = vmax.f32 %v652, 0.0
    %v717 = vmax.f32 %v653, 0.0
    %v718 = vmax.f32 %v654, 0.0
    %v719 = vmax.f32 %v655, 0.0
    %v720 = vmax.f32 %v656, 0.0
    %v721 = vmax.f32 %v657, 0.0
    %v722 = vmax.f32 %v658, 0.0
    %v723 = vmax.f32 %v659, 0.0
    %v724 = vmax.f32 %v660, 0.0
    %v725 = vmax.f32 %v661, 0.0
    %v726 = vmax.f32 %v662, 0.0
    %v727 = vmax.f32 %v663, 0.0
    %v728 = vmax.f32 %v664, 0.0
    %v729 = vmax.f32 %v665, 0.0
    %v730 = vmax.f32 %v666, 0.0
    %v731 = vmax.f32 %v667, 0.0
    %v732 = vmax.f32 %v668, 0.0
    %v733 = vmax.f32 %v669, 0.0
    %v734 = vmax.f32 %v670, 0.0
    %v735 = vmax.f32 %v671, 0.0
    %v736 = vmax.f32 %v672, 0.0
    %v737 = vmax.f32 %v673, 0.0
    %v738 = vmax.f32 %v674, 0.0
    %v739 = vmax.f32 %v675, 0.0
    %v740 = vmax.f32 %v676, 0.0
    %v741 = vmax.f32 %v677, 0.0
    %v742 = vmax.f32 %v678, 0.0
    %v743 = vmax.f32 %v679, 0.0
    %v744 = vmax.f32 %v680, 0.0
    %v745 = vmax.f32 %v681, 0.0
    %v746 = vmax.f32 %v682, 0.0
    %v747 = vmax.f32 %v683, 0.0
    %v748 = vmax.f32 %v684, 0.0
    %v749 = vmax.f32 %v685, 0.0
    %v750 = vmax.f32 %v686, 0.0
    %v751 = vmax.f32 %v687, 0.0
    %v752 = vmax.f32 %v688, 0.0
    %v753 = vmax.f32 %v689, 0.0
    %v754 = vmax.f32 %v690, 0.0
    %v755 = vmax.f32 %v691, 0.0
    %v756 = vmax.f32 %v692, 0.0
    %v757 = vld [vmem:[#allocation7] sm:$0xff]
    %v758 = vld [vmem:[#allocation7 + $0x8] sm:$0xff]
    %v759 = vld [vmem:[#allocation7 + $0x10] sm:$0xff]
    %v760 = vld [vmem:[#allocation7 + $0x18] sm:$0xff]
    %v761 = vld [vmem:[#allocation7 + $0x20] sm:$0xff]
    %v762 = vld [vmem:[#allocation7 + $0x28] sm:$0xff]
    %v763 = vld [vmem:[#allocation7 + $0x30] sm:$0xff]
    %v764 = vld [vmem:[#allocation7 + $0x38] sm:$0xff]
    %v765 = vld [vmem:[#allocation7 + $0x40] sm:$0xff]
    %v766 = vld [vmem:[#allocation7 + $0x48] sm:$0xff]
    %v767 = vld [vmem:[#allocation7 + $0x50] sm:$0xff]
    %v768 = vld [vmem:[#allocation7 + $0x58] sm:$0xff]
    %v769 = vld [vmem:[#allocation7 + $0x60] sm:$0xff]
    %v770 = vld [vmem:[#allocation7 + $0x68] sm:$0xff]
    %v771 = vld [vmem:[#allocation7 + $0x70] sm:$0xff]
    %v772 = vld [vmem:[#allocation7 + $0x78] sm:$0xff]
    %v773 = vld [vmem:[#allocation7 + $0x80] sm:$0xff]
    %v774 = vld [vmem:[#allocation7 + $0x88] sm:$0xff]
    %v775 = vld [vmem:[#allocation7 + $0x90] sm:$0xff]
    %v776 = vld [vmem:[#allocation7 + $0x98] sm:$0xff]
    %v777 = vld [vmem:[#allocation7 + $0xa0] sm:$0xff]
    %v778 = vld [vmem:[#allocation7 + $0xa8] sm:$0xff]
    %v779 = vld [vmem:[#allocation7 + $0xb0] sm:$0xff]
    %v780 = vld [vmem:[#allocation7 + $0xb8] sm:$0xff]
    %v781 = vld [vmem:[#allocation7 + $0xc0] sm:$0xff]
    %v782 = vld [vmem:[#allocation7 + $0xc8] sm:$0xff]
    %v783 = vld [vmem:[#allocation7 + $0xd0] sm:$0xff]
    %v784 = vld [vmem:[#allocation7 + $0xd8] sm:$0xff]
    %v785 = vld [vmem:[#allocation7 + $0xe0] sm:$0xff]
    %v786 = vld [vmem:[#allocation7 + $0xe8] sm:$0xff]
    %v787 = vld [vmem:[#allocation7 + $0xf0] sm:$0xff]
    %v788 = vld [vmem:[#allocation7 + $0xf8] sm:$0xff]
    %v789 = vld [vmem:[#allocation7 + $0x100] sm:$0xff]
    %v790 = vld [vmem:[#allocation7 + $0x108] sm:$0xff]
    %v791 = vld [vmem:[#allocation7 + $0x110] sm:$0xff]
    %v792 = vld [vmem:[#allocation7 + $0x118] sm:$0xff]
    %v793 = vld [vmem:[#allocation7 + $0x120] sm:$0xff]
    %v794 = vld [vmem:[#allocation7 + $0x128] sm:$0xff]
    %v795 = vld [vmem:[#allocation7 + $0x130] sm:$0xff]
    %v796 = vld [vmem:[#allocation7 + $0x138] sm:$0xff]
    %v797 = vld [vmem:[#allocation7 + $0x140] sm:$0xff]
    %v798 = vld [vmem:[#allocation7 + $0x148] sm:$0xff]
    %v799 = vld [vmem:[#allocation7 + $0x150] sm:$0xff]
    %v800 = vld [vmem:[#allocation7 + $0x158] sm:$0xff]
    %v801 = vld [vmem:[#allocation7 + $0x160] sm:$0xff]
    %v802 = vld [vmem:[#allocation7 + $0x168] sm:$0xff]
    %v803 = vld [vmem:[#allocation7 + $0x170] sm:$0xff]
    %v804 = vld [vmem:[#allocation7 + $0x178] sm:$0xff]
    %v805 = vld [vmem:[#allocation7 + $0x180] sm:$0xff]
    %v806 = vld [vmem:[#allocation7 + $0x188] sm:$0xff]
    %v807 = vld [vmem:[#allocation7 + $0x190] sm:$0xff]
    %v808 = vld [vmem:[#allocation7 + $0x198] sm:$0xff]
    %v809 = vld [vmem:[#allocation7 + $0x1a0] sm:$0xff]
    %v810 = vld [vmem:[#allocation7 + $0x1a8] sm:$0xff]
    %v811 = vld [vmem:[#allocation7 + $0x1b0] sm:$0xff]
    %v812 = vld [vmem:[#allocation7 + $0x1b8] sm:$0xff]
    %v813 = vld [vmem:[#allocation7 + $0x1c0] sm:$0xff]
    %v814 = vld [vmem:[#allocation7 + $0x1c8] sm:$0xff]
    %v815 = vld [vmem:[#allocation7 + $0x1d0] sm:$0xff]
    %v816 = vld [vmem:[#allocation7 + $0x1d8] sm:$0xff]
    %v817 = vld [vmem:[#allocation7 + $0x1e0] sm:$0xff]
    %v818 = vld [vmem:[#allocation7 + $0x1e8] sm:$0xff]
    %v819 = vld [vmem:[#allocation7 + $0x1f0] sm:$0xff]
    %v820 = vld [vmem:[#allocation7 + $0x1f8] sm:$0xff]
    %821 = vmatpush.msra.mxu0 %v787
    %822 = vmatpush.msra.mxu0 %v785
    %823 = vmatpush.msra.mxu0 %v783
    %824 = vmatpush.msra.mxu0 %v781
    %825 = vmatpush.msra.mxu0 %v779
    %826 = vmatpush.msra.mxu0 %v777
    %827 = vmatpush.msra.mxu0 %v775
    %828 = vmatpush.msra.mxu0 %v773
    %829 = vmatpush.msra.mxu0 %v771
    %830 = vmatpush.msra.mxu0 %v769
    %831 = vmatpush.msra.mxu0 %v767
    %832 = vmatpush.msra.mxu0 %v765
    %833 = vmatpush.msra.mxu0 %v763
    %834 = vmatpush.msra.mxu0 %v761
    %835 = vmatpush.msra.mxu0 %v759
    %836 = vmatpush.msra.mxu0 %v757
    %837 = vmatmul.f32.gmra.mxu0 %v693
    %v838 = vpop.f32.mrf.mxu0
    %v839 = vadd.f32 %v415, %v838
    %840 = vmatmul.f32.gmra.mxu0 %v695
    %v841 = vpop.f32.mrf.mxu0
    %v842 = vadd.f32 %v418, %v841
    %843 = vmatmul.f32.gmra.mxu0 %v697
    %v844 = vpop.f32.mrf.mxu0
    %v845 = vadd.f32 %v421, %v844
    %846 = vmatmul.f32.gmra.mxu0 %v699
    %v847 = vpop.f32.mrf.mxu0
    %v848 = vadd.f32 %v424, %v847
    %849 = vmatmul.f32.gmra.mxu0 %v701
    %v850 = vpop.f32.mrf.mxu0
    %v851 = vadd.f32 %v427, %v850
    %852 = vmatmul.f32.gmra.mxu0 %v703
    %v853 = vpop.f32.mrf.mxu0
    %v854 = vadd.f32 %v430, %v853
    %855 = vmatmul.f32.gmra.mxu0 %v705
    %v856 = vpop.f32.mrf.mxu0
    %v857 = vadd.f32 %v433, %v856
    %858 = vmatmul.f32.gmra.mxu0 %v707
    %v859 = vpop.f32.mrf.mxu0
    %v860 = vadd.f32 %v436, %v859
    %861 = vmatmul.f32.gmra.mxu0 %v709
    %v862 = vpop.f32.mrf.mxu0
    %v863 = vadd.f32 %v439, %v862
    %864 = vmatmul.f32.gmra.mxu0 %v711
    %v865 = vpop.f32.mrf.mxu0
    %v866 = vadd.f32 %v442, %v865
    %867 = vmatmul.f32.gmra.mxu0 %v713
    %v868 = vpop.f32.mrf.mxu0
    %v869 = vadd.f32 %v445, %v868
    %870 = vmatmul.f32.gmra.mxu0 %v715
    %v871 = vpop.f32.mrf.mxu0
    %v872 = vadd.f32 %v448, %v871
    %873 = vmatmul.f32.gmra.mxu0 %v717
    %v874 = vpop.f32.mrf.mxu0
    %v875 = vadd.f32 %v451, %v874
    %876 = vmatmul.f32.gmra.mxu0 %v719
    %v877 = vpop.f32.mrf.mxu0
    %v878 = vadd.f32 %v454, %v877
    %879 = vmatmul.f32.gmra.mxu0 %v721
    %v880 = vpop.f32.mrf.mxu0
    %v881 = vadd.f32 %v457, %v880
    %882 = vmatmul.f32.gmra.mxu0 %v723
    %v883 = vpop.f32.mrf.mxu0
    %v884 = vadd.f32 %v460, %v883
    %885 = vmatmul.f32.gmra.mxu0 %v725
    %v886 = vpop.f32.mrf.mxu0
    %v887 = vadd.f32 %v463, %v886
    %888 = vmatmul.f32.gmra.mxu0 %v727
    %v889 = vpop.f32.mrf.mxu0
    %v890 = vadd.f32 %v466, %v889
    %891 = vmatmul.f32.gmra.mxu0 %v729
    %v892 = vpop.f32.mrf.mxu0
    %v893 = vadd.f32 %v469, %v892
    %894 = vmatmul.f32.gmra.mxu0 %v731
    %v895 = vpop.f32.mrf.mxu0
    %v896 = vadd.f32 %v472, %v895
    %897 = vmatmul.f32.gmra.mxu0 %v733
    %v898 = vpop.f32.mrf.mxu0
    %v899 = vadd.f32 %v475, %v898
    %900 = vmatmul.f32.gmra.mxu0 %v735
    %v901 = vpop.f32.mrf.mxu0
    %v902 = vadd.f32 %v478, %v901
    %903 = vmatmul.f32.gmra.mxu0 %v737
    %v904 = vpop.f32.mrf.mxu0
    %v905 = vadd.f32 %v481, %v904
    %906 = vmatmul.f32.gmra.mxu0 %v739
    %v907 = vpop.f32.mrf.mxu0
    %v908 = vadd.f32 %v484, %v907
    %909 = vmatmul.f32.gmra.mxu0 %v741
    %v910 = vpop.f32.mrf.mxu0
    %v911 = vadd.f32 %v487, %v910
    %912 = vmatmul.f32.gmra.mxu0 %v743
    %v913 = vpop.f32.mrf.mxu0
    %v914 = vadd.f32 %v490, %v913
    %915 = vmatmul.f32.gmra.mxu0 %v745
    %v916 = vpop.f32.mrf.mxu0
    %v917 = vadd.f32 %v493, %v916
    %918 = vmatmul.f32.gmra.mxu0 %v747
    %v919 = vpop.f32.mrf.mxu0
    %v920 = vadd.f32 %v496, %v919
    %921 = vmatmul.f32.gmra.mxu0 %v749
    %v922 = vpop.f32.mrf.mxu0
    %v923 = vadd.f32 %v499, %v922
    %924 = vmatmul.f32.gmra.mxu0 %v751
    %v925 = vpop.f32.mrf.mxu0
    %v926 = vadd.f32 %v502, %v925
    %927 = vmatmul.f32.gmra.mxu0 %v753
    %v928 = vpop.f32.mrf.mxu0
    %v929 = vadd.f32 %v505, %v928
    %930 = vmatmul.f32.gmra.mxu0 %v755
    %v931 = vpop.f32.mrf.mxu0
    %v932 = vadd.f32 %v508, %v931
    %933 = vdwg.mxu0
    %934 = vmatpush.msra.mxu0 %v819
    %935 = vmatpush.msra.mxu0 %v817
    %936 = vmatpush.msra.mxu0 %v815
    %937 = vmatpush.msra.mxu0 %v813
    %938 = vmatpush.msra.mxu0 %v811
    %939 = vmatpush.msra.mxu0 %v809
    %940 = vmatpush.msra.mxu0 %v807
    %941 = vmatpush.msra.mxu0 %v805
    %942 = vmatpush.msra.mxu0 %v803
    %943 = vmatpush.msra.mxu0 %v801
    %944 = vmatpush.msra.mxu0 %v799
    %945 = vmatpush.msra.mxu0 %v797
    %946 = vmatpush.msra.mxu0 %v795
    %947 = vmatpush.msra.mxu0 %v793
    %948 = vmatpush.msra.mxu0 %v791
    %949 = vmatpush.msra.mxu0 %v789
    %950 = vmatmul.f32.gmra.mxu0 %v694
    %v951 = vpop.f32.mrf.mxu0
    %v952 = vadd.f32 %v839, %v951
    %953 = vmatmul.f32.gmra.mxu0 %v696
    %v954 = vpop.f32.mrf.mxu0
    %v955 = vadd.f32 %v842, %v954
    %956 = vmatmul.f32.gmra.mxu0 %v698
    %v957 = vpop.f32.mrf.mxu0
    %v958 = vadd.f32 %v845, %v957
    %959 = vmatmul.f32.gmra.mxu0 %v700
    %v960 = vpop.f32.mrf.mxu0
    %v961 = vadd.f32 %v848, %v960
    %962 = vmatmul.f32.gmra.mxu0 %v702
    %v963 = vpop.f32.mrf.mxu0
    %v964 = vadd.f32 %v851, %v963
    %965 = vmatmul.f32.gmra.mxu0 %v704
    %v966 = vpop.f32.mrf.mxu0
    %v967 = vadd.f32 %v854, %v966
    %968 = vmatmul.f32.gmra.mxu0 %v706
    %v969 = vpop.f32.mrf.mxu0
    %v970 = vadd.f32 %v857, %v969
    %971 = vmatmul.f32.gmra.mxu0 %v708
    %v972 = vpop.f32.mrf.mxu0
    %v973 = vadd.f32 %v860, %v972
    %974 = vmatmul.f32.gmra.mxu0 %v710
    %v975 = vpop.f32.mrf.mxu0
    %v976 = vadd.f32 %v863, %v975
    %977 = vmatmul.f32.gmra.mxu0 %v712
    %v978 = vpop.f32.mrf.mxu0
    %v979 = vadd.f32 %v866, %v978
    %980 = vmatmul.f32.gmra.mxu0 %v714
    %v981 = vpop.f32.mrf.mxu0
    %v982 = vadd.f32 %v869, %v981
    %983 = vmatmul.f32.gmra.mxu0 %v716
    %v984 = vpop.f32.mrf.mxu0
    %v985 = vadd.f32 %v872, %v984
    %986 = vmatmul.f32.gmra.mxu0 %v718
    %v987 = vpop.f32.mrf.mxu0
    %v988 = vadd.f32 %v875, %v987
    %989 = vmatmul.f32.gmra.mxu0 %v720
    %v990 = vpop.f32.mrf.mxu0
    %v991 = vadd.f32 %v878, %v990
    %992 = vmatmul.f32.gmra.mxu0 %v722
    %v993 = vpop.f32.mrf.mxu0
    %v994 = vadd.f32 %v881, %v993
    %995 = vmatmul.f32.gmra.mxu0 %v724
    %v996 = vpop.f32.mrf.mxu0
    %v997 = vadd.f32 %v884, %v996
    %998 = vmatmul.f32.gmra.mxu0 %v726
    %v999 = vpop.f32.mrf.mxu0
    %v1000 = vadd.f32 %v887, %v999
    %1001 = vmatmul.f32.gmra.mxu0 %v728
    %v1002 = vpop.f32.mrf.mxu0
    %v1003 = vadd.f32 %v890, %v1002
    %1004 = vmatmul.f32.gmra.mxu0 %v730
    %v1005 = vpop.f32.mrf.mxu0
    %v1006 = vadd.f32 %v893, %v1005
    %1007 = vmatmul.f32.gmra.mxu0 %v732
    %v1008 = vpop.f32.mrf.mxu0
    %v1009 = vadd.f32 %v896, %v1008
    %1010 = vmatmul.f32.gmra.mxu0 %v734
    %v1011 = vpop.f32.mrf.mxu0
    %v1012 = vadd.f32 %v899, %v1011
    %1013 = vmatmul.f32.gmra.mxu0 %v736
    %v1014 = vpop.f32.mrf.mxu0
    %v1015 = vadd.f32 %v902, %v1014
    %1016 = vmatmul.f32.gmra.mxu0 %v738
    %v1017 = vpop.f32.mrf.mxu0
    %v1018 = vadd.f32 %v905, %v1017
    %1019 = vmatmul.f32.gmra.mxu0 %v740
    %v1020 = vpop.f32.mrf.mxu0
    %v1021 = vadd.f32 %v908, %v1020
    %1022 = vmatmul.f32.gmra.mxu0 %v742
    %v1023 = vpop.f32.mrf.mxu0
    %v1024 = vadd.f32 %v911, %v1023
    %1025 = vmatmul.f32.gmra.mxu0 %v744
    %v1026 = vpop.f32.mrf.mxu0
    %v1027 = vadd.f32 %v914, %v1026
    %1028 = vmatmul.f32.gmra.mxu0 %v746
    %v1029 = vpop.f32.mrf.mxu0
    %v1030 = vadd.f32 %v917, %v1029
    %1031 = vmatmul.f32.gmra.mxu0 %v748
    %v1032 = vpop.f32.mrf.mxu0
    %v1033 = vadd.f32 %v920, %v1032
    %1034 = vmatmul.f32.gmra.mxu0 %v750
    %v1035 = vpop.f32.mrf.mxu0
    %v1036 = vadd.f32 %v923, %v1035
    %1037 = vmatmul.f32.gmra.mxu0 %v752
    %v1038 = vpop.f32.mrf.mxu0
    %v1039 = vadd.f32 %v926, %v1038
    %1040 = vmatmul.f32.gmra.mxu0 %v754
    %v1041 = vpop.f32.mrf.mxu0
    %v1042 = vadd.f32 %v929, %v1041
    %1043 = vmatmul.f32.gmra.mxu0 %v756
    %v1044 = vpop.f32.mrf.mxu0
    %v1045 = vadd.f32 %v932, %v1044
    %1046 = vdwg.mxu0
    %1047 = vmatpush.msra.mxu0 %v788
    %1048 = vmatpush.msra.mxu0 %v786
    %1049 = vmatpush.msra.mxu0 %v784
    %1050 = vmatpush.msra.mxu0 %v782
    %1051 = vmatpush.msra.mxu0 %v780
    %1052 = vmatpush.msra.mxu0 %v778
    %1053 = vmatpush.msra.mxu0 %v776
    %1054 = vmatpush.msra.mxu0 %v774
    %1055 = vmatpush.msra.mxu0 %v772
    %1056 = vmatpush.msra.mxu0 %v770
    %1057 = vmatpush.msra.mxu0 %v768
    %1058 = vmatpush.msra.mxu0 %v766
    %1059 = vmatpush.msra.mxu0 %v764
    %1060 = vmatpush.msra.mxu0 %v762
    %1061 = vmatpush.msra.mxu0 %v760
    %1062 = vmatpush.msra.mxu0 %v758
    %1063 = vmatmul.f32.gmra.mxu0 %v693
    %v1064 = vpop.f32.mrf.mxu0
    %v1065 = vadd.f32 %v528, %v1064
    %1066 = vmatmul.f32.gmra.mxu0 %v695
    %v1067 = vpop.f32.mrf.mxu0
    %v1068 = vadd.f32 %v531, %v1067
    %1069 = vmatmul.f32.gmra.mxu0 %v697
    %v1070 = vpop.f32.mrf.mxu0
    %v1071 = vadd.f32 %v534, %v1070
    %1072 = vmatmul.f32.gmra.mxu0 %v699
    %v1073 = vpop.f32.mrf.mxu0
    %v1074 = vadd.f32 %v537, %v1073
    %1075 = vmatmul.f32.gmra.mxu0 %v701
    %v1076 = vpop.f32.mrf.mxu0
    %v1077 = vadd.f32 %v540, %v1076
    %1078 = vmatmul.f32.gmra.mxu0 %v703
    %v1079 = vpop.f32.mrf.mxu0
    %v1080 = vadd.f32 %v543, %v1079
    %1081 = vmatmul.f32.gmra.mxu0 %v705
    %v1082 = vpop.f32.mrf.mxu0
    %v1083 = vadd.f32 %v546, %v1082
    %1084 = vmatmul.f32.gmra.mxu0 %v707
    %v1085 = vpop.f32.mrf.mxu0
    %v1086 = vadd.f32 %v549, %v1085
    %1087 = vmatmul.f32.gmra.mxu0 %v709
    %v1088 = vpop.f32.mrf.mxu0
    %v1089 = vadd.f32 %v552, %v1088
    %1090 = vmatmul.f32.gmra.mxu0 %v711
    %v1091 = vpop.f32.mrf.mxu0
    %v1092 = vadd.f32 %v555, %v1091
    %1093 = vmatmul.f32.gmra.mxu0 %v713
    %v1094 = vpop.f32.mrf.mxu0
    %v1095 = vadd.f32 %v558, %v1094
    %1096 = vmatmul.f32.gmra.mxu0 %v715
    %v1097 = vpop.f32.mrf.mxu0
    %v1098 = vadd.f32 %v561, %v1097
    %1099 = vmatmul.f32.gmra.mxu0 %v717
    %v1100 = vpop.f32.mrf.mxu0
    %v1101 = vadd.f32 %v564, %v1100
    %1102 = vmatmul.f32.gmra.mxu0 %v719
    %v1103 = vpop.f32.mrf.mxu0
    %v1104 = vadd.f32 %v567, %v1103
    %1105 = vmatmul.f32.gmra.mxu0 %v721
    %v1106 = vpop.f32.mrf.mxu0
    %v1107 = vadd.f32 %v570, %v1106
    %1108 = vmatmul.f32.gmra.mxu0 %v723
    %v1109 = vpop.f32.mrf.mxu0
    %v1110 = vadd.f32 %v573, %v1109
    %1111 = vmatmul.f32.gmra.mxu0 %v725
    %v1112 = vpop.f32.mrf.mxu0
    %v1113 = vadd.f32 %v576, %v1112
    %1114 = vmatmul.f32.gmra.mxu0 %v727
    %v1115 = vpop.f32.mrf.mxu0
    %v1116 = vadd.f32 %v579, %v1115
    %1117 = vmatmul.f32.gmra.mxu0 %v729
    %v1118 = vpop.f32.mrf.mxu0
    %v1119 = vadd.f32 %v582, %v1118
    %1120 = vmatmul.f32.gmra.mxu0 %v731
    %v1121 = vpop.f32.mrf.mxu0
    %v1122 = vadd.f32 %v585, %v1121
    %1123 = vmatmul.f32.gmra.mxu0 %v733
    %v1124 = vpop.f32.mrf.mxu0
    %v1125 = vadd.f32 %v588, %v1124
    %1126 = vmatmul.f32.gmra.mxu0 %v735
    %v1127 = vpop.f32.mrf.mxu0
    %v1128 = vadd.f32 %v591, %v1127
    %1129 = vmatmul.f32.gmra.mxu0 %v737
    %v1130 = vpop.f32.mrf.mxu0
    %v1131 = vadd.f32 %v594, %v1130
    %1132 = vmatmul.f32.gmra.mxu0 %v739
    %v1133 = vpop.f32.mrf.mxu0
    %v1134 = vadd.f32 %v597, %v1133
    %1135 = vmatmul.f32.gmra.mxu0 %v741
    %v1136 = vpop.f32.mrf.mxu0
    %v1137 = vadd.f32 %v600, %v1136
    %1138 = vmatmul.f32.gmra.mxu0 %v743
    %v1139 = vpop.f32.mrf.mxu0
    %v1140 = vadd.f32 %v603, %v1139
    %1141 = vmatmul.f32.gmra.mxu0 %v745
    %v1142 = vpop.f32.mrf.mxu0
    %v1143 = vadd.f32 %v606, %v1142
    %1144 = vmatmul.f32.gmra.mxu0 %v747
    %v1145 = vpop.f32.mrf.mxu0
    %v1146 = vadd.f32 %v609, %v1145
    %1147 = vmatmul.f32.gmra.mxu0 %v749
    %v1148 = vpop.f32.mrf.mxu0
    %v1149 = vadd.f32 %v612, %v1148
    %1150 = vmatmul.f32.gmra.mxu0 %v751
    %v1151 = vpop.f32.mrf.mxu0
    %v1152 = vadd.f32 %v615, %v1151
    %1153 = vmatmul.f32.gmra.mxu0 %v753
    %v1154 = vpop.f32.mrf.mxu0
    %v1155 = vadd.f32 %v618, %v1154
    %1156 = vmatmul.f32.gmra.mxu0 %v755
    %v1157 = vpop.f32.mrf.mxu0
    %v1158 = vadd.f32 %v621, %v1157
    %1159 = vdwg.mxu0
    %1160 = vmatpush.msra.mxu0 %v820
    %1161 = vmatpush.msra.mxu0 %v818
    %1162 = vmatpush.msra.mxu0 %v816
    %1163 = vmatpush.msra.mxu0 %v814
    %1164 = vmatpush.msra.mxu0 %v812
    %1165 = vmatpush.msra.mxu0 %v810
    %1166 = vmatpush.msra.mxu0 %v808
    %1167 = vmatpush.msra.mxu0 %v806
    %1168 = vmatpush.msra.mxu0 %v804
    %1169 = vmatpush.msra.mxu0 %v802
    %1170 = vmatpush.msra.mxu0 %v800
    %1171 = vmatpush.msra.mxu0 %v798
    %1172 = vmatpush.msra.mxu0 %v796
    %1173 = vmatpush.msra.mxu0 %v794
    %1174 = vmatpush.msra.mxu0 %v792
    %1175 = vmatpush.msra.mxu0 %v790
    %1176 = vmatmul.f32.gmra.mxu0 %v694
    %v1177 = vpop.f32.mrf.mxu0
    %v1178 = vadd.f32 %v1065, %v1177
    %1179 = vmatmul.f32.gmra.mxu0 %v696
    %v1180 = vpop.f32.mrf.mxu0
    %v1181 = vadd.f32 %v1068, %v1180
    %1182 = vmatmul.f32.gmra.mxu0 %v698
    %v1183 = vpop.f32.mrf.mxu0
    %v1184 = vadd.f32 %v1071, %v1183
    %1185 = vmatmul.f32.gmra.mxu0 %v700
    %v1186 = vpop.f32.mrf.mxu0
    %v1187 = vadd.f32 %v1074, %v1186
    %1188 = vmatmul.f32.gmra.mxu0 %v702
    %v1189 = vpop.f32.mrf.mxu0
    %v1190 = vadd.f32 %v1077, %v1189
    %1191 = vmatmul.f32.gmra.mxu0 %v704
    %v1192 = vpop.f32.mrf.mxu0
    %v1193 = vadd.f32 %v1080, %v1192
    %1194 = vmatmul.f32.gmra.mxu0 %v706
    %v1195 = vpop.f32.mrf.mxu0
    %v1196 = vadd.f32 %v1083, %v1195
    %1197 = vmatmul.f32.gmra.mxu0 %v708
    %v1198 = vpop.f32.mrf.mxu0
    %v1199 = vadd.f32 %v1086, %v1198
    %1200 = vmatmul.f32.gmra.mxu0 %v710
    %v1201 = vpop.f32.mrf.mxu0
    %v1202 = vadd.f32 %v1089, %v1201
    %1203 = vmatmul.f32.gmra.mxu0 %v712
    %v1204 = vpop.f32.mrf.mxu0
    %v1205 = vadd.f32 %v1092, %v1204
    %1206 = vmatmul.f32.gmra.mxu0 %v714
    %v1207 = vpop.f32.mrf.mxu0
    %v1208 = vadd.f32 %v1095, %v1207
    %1209 = vmatmul.f32.gmra.mxu0 %v716
    %v1210 = vpop.f32.mrf.mxu0
    %v1211 = vadd.f32 %v1098, %v1210
    %1212 = vmatmul.f32.gmra.mxu0 %v718
    %v1213 = vpop.f32.mrf.mxu0
    %v1214 = vadd.f32 %v1101, %v1213
    %1215 = vmatmul.f32.gmra.mxu0 %v720
    %v1216 = vpop.f32.mrf.mxu0
    %v1217 = vadd.f32 %v1104, %v1216
    %1218 = vmatmul.f32.gmra.mxu0 %v722
    %v1219 = vpop.f32.mrf.mxu0
    %v1220 = vadd.f32 %v1107, %v1219
    %1221 = vmatmul.f32.gmra.mxu0 %v724
    %v1222 = vpop.f32.mrf.mxu0
    %v1223 = vadd.f32 %v1110, %v1222
    %1224 = vmatmul.f32.gmra.mxu0 %v726
    %v1225 = vpop.f32.mrf.mxu0
    %v1226 = vadd.f32 %v1113, %v1225
    %1227 = vmatmul.f32.gmra.mxu0 %v728
    %v1228 = vpop.f32.mrf.mxu0
    %v1229 = vadd.f32 %v1116, %v1228
    %1230 = vmatmul.f32.gmra.mxu0 %v730
    %v1231 = vpop.f32.mrf.mxu0
    %v1232 = vadd.f32 %v1119, %v1231
    %1233 = vmatmul.f32.gmra.mxu0 %v732
    %v1234 = vpop.f32.mrf.mxu0
    %v1235 = vadd.f32 %v1122, %v1234
    %1236 = vmatmul.f32.gmra.mxu0 %v734
    %v1237 = vpop.f32.mrf.mxu0
    %v1238 = vadd.f32 %v1125, %v1237
    %1239 = vmatmul.f32.gmra.mxu0 %v736
    %v1240 = vpop.f32.mrf.mxu0
    %v1241 = vadd.f32 %v1128, %v1240
    %1242 = vmatmul.f32.gmra.mxu0 %v738
    %v1243 = vpop.f32.mrf.mxu0
    %v1244 = vadd.f32 %v1131, %v1243
    %1245 = vmatmul.f32.gmra.mxu0 %v740
    %v1246 = vpop.f32.mrf.mxu0
    %v1247 = vadd.f32 %v1134, %v1246
    %1248 = vmatmul.f32.gmra.mxu0 %v742
    %v1249 = vpop.f32.mrf.mxu0
    %v1250 = vadd.f32 %v1137, %v1249
    %1251 = vmatmul.f32.gmra.mxu0 %v744
    %v1252 = vpop.f32.mrf.mxu0
    %v1253 = vadd.f32 %v1140, %v1252
    %1254 = vmatmul.f32.gmra.mxu0 %v746
    %v1255 = vpop.f32.mrf.mxu0
    %v1256 = vadd.f32 %v1143, %v1255
    %1257 = vmatmul.f32.gmra.mxu0 %v748
    %v1258 = vpop.f32.mrf.mxu0
    %v1259 = vadd.f32 %v1146, %v1258
    %1260 = vmatmul.f32.gmra.mxu0 %v750
    %v1261 = vpop.f32.mrf.mxu0
    %v1262 = vadd.f32 %v1149, %v1261
    %1263 = vmatmul.f32.gmra.mxu0 %v752
    %v1264 = vpop.f32.mrf.mxu0
    %v1265 = vadd.f32 %v1152, %v1264
    %1266 = vmatmul.f32.gmra.mxu0 %v754
    %v1267 = vpop.f32.mrf.mxu0
    %v1268 = vadd.f32 %v1155, %v1267
    %1269 = vmatmul.f32.gmra.mxu0 %v756
    %v1270 = vpop.f32.mrf.mxu0
    %v1271 = vadd.f32 %v1158, %v1270
    %1272 = vdwg.mxu0
    %v1273 = vld [vmem:[%s4] sm:$0x3]
    %v1275 = vperm.slane %v1273, 0
    %v1276 = vperm.slane %v1273, 1
    %v1279 = vadd.f32 %v952, %v1275
    %v1280 = vadd.f32 %v1178, %v1276
    %v1281 = vadd.f32 %v955, %v1275
    %v1282 = vadd.f32 %v1181, %v1276
    %v1283 = vadd.f32 %v958, %v1275
    %v1284 = vadd.f32 %v1184, %v1276
    %v1285 = vadd.f32 %v961, %v1275
    %v1286 = vadd.f32 %v1187, %v1276
    %v1287 = vadd.f32 %v964, %v1275
    %v1288 = vadd.f32 %v1190, %v1276
    %v1289 = vadd.f32 %v967, %v1275
    %v1290 = vadd.f32 %v1193, %v1276
    %v1291 = vadd.f32 %v970, %v1275
    %v1292 = vadd.f32 %v1196, %v1276
    %v1293 = vadd.f32 %v973, %v1275
    %v1294 = vadd.f32 %v1199, %v1276
    %v1295 = vadd.f32 %v976, %v1275
    %v1296 = vadd.f32 %v1202, %v1276
    %v1297 = vadd.f32 %v979, %v1275
    %v1298 = vadd.f32 %v1205, %v1276
    %v1299 = vadd.f32 %v982, %v1275
    %v1300 = vadd.f32 %v1208, %v1276
    %v1301 = vadd.f32 %v985, %v1275
    %v1302 = vadd.f32 %v1211, %v1276
    %v1303 = vadd.f32 %v988, %v1275
    %v1304 = vadd.f32 %v1214, %v1276
    %v1305 = vadd.f32 %v991, %v1275
    %v1306 = vadd.f32 %v1217, %v1276
    %v1307 = vadd.f32 %v994, %v1275
    %v1308 = vadd.f32 %v1220, %v1276
    %v1309 = vadd.f32 %v997, %v1275
    %v1310 = vadd.f32 %v1223, %v1276
    %v1311 = vadd.f32 %v1000, %v1275
    %v1312 = vadd.f32 %v1226, %v1276
    %v1313 = vadd.f32 %v1003, %v1275
    %v1314 = vadd.f32 %v1229, %v1276
    %v1315 = vadd.f32 %v1006, %v1275
    %v1316 = vadd.f32 %v1232, %v1276
    %v1317 = vadd.f32 %v1009, %v1275
    %v1318 = vadd.f32 %v1235, %v1276
    %v1319 = vadd.f32 %v1012, %v1275
    %v1320 = vadd.f32 %v1238, %v1276
    %v1321 = vadd.f32 %v1015, %v1275
    %v1322 = vadd.f32 %v1241, %v1276
    %v1323 = vadd.f32 %v1018, %v1275
    %v1324 = vadd.f32 %v1244, %v1276
    %v1325 = vadd.f32 %v1021, %v1275
    %v1326 = vadd.f32 %v1247, %v1276
    %v1327 = vadd.f32 %v1024, %v1275
    %v1328 = vadd.f32 %v1250, %v1276
    %v1329 = vadd.f32 %v1027, %v1275
    %v1330 = vadd.f32 %v1253, %v1276
    %v1331 = vadd.f32 %v1030, %v1275
    %v1332 = vadd.f32 %v1256, %v1276
    %v1333 = vadd.f32 %v1033, %v1275
    %v1334 = vadd.f32 %v1259, %v1276
    %v1335 = vadd.f32 %v1036, %v1275
    %v1336 = vadd.f32 %v1262, %v1276
    %v1337 = vadd.f32 %v1039, %v1275
    %v1338 = vadd.f32 %v1265, %v1276
    %v1339 = vadd.f32 %v1042, %v1275
    %v1340 = vadd.f32 %v1268, %v1276
    %v1341 = vadd.f32 %v1045, %v1275
    %v1342 = vadd.f32 %v1271, %v1276
    %v1343 = vmax.f32 %v1279, 0.0
    %v1344 = vmax.f32 %v1280, 0.0
    %v1345 = vmax.f32 %v1281, 0.0
    %v1346 = vmax.f32 %v1282, 0.0
    %v1347 = vmax.f32 %v1283, 0.0
    %v1348 = vmax.f32 %v1284, 0.0
    %v1349 = vmax.f32 %v1285, 0.0
    %v1350 = vmax.f32 %v1286, 0.0
    %v1351 = vmax.f32 %v1287, 0.0
    %v1352 = vmax.f32 %v1288, 0.0
    %v1353 = vmax.f32 %v1289, 0.0
    %v1354 = vmax.f32 %v1290, 0.0
    %v1355 = vmax.f32 %v1291, 0.0
    %v1356 = vmax.f32 %v1292, 0.0
    %v1357 = vmax.f32 %v1293, 0.0
    %v1358 = vmax.f32 %v1294, 0.0
    %v1359 = vmax.f32 %v1295, 0.0
    %v1360 = vmax.f32 %v1296, 0.0
    %v1361 = vmax.f32 %v1297, 0.0
    %v1362 = vmax.f32 %v1298, 0.0
    %v1363 = vmax.f32 %v1299, 0.0
    %v1364 = vmax.f32 %v1300, 0.0
    %v1365 = vmax.f32 %v1301, 0.0
    %v1366 = vmax.f32 %v1302, 0.0
    %v1367 = vmax.f32 %v1303, 0.0
    %v1368 = vmax.f32 %v1304, 0.0
    %v1369 = vmax.f32 %v1305, 0.0
    %v1370 = vmax.f32 %v1306, 0.0
    %v1371 = vmax.f32 %v1307, 0.0
    %v1372 = vmax.f32 %v1308, 0.0
    %v1373 = vmax.f32 %v1309, 0.0
    %v1374 = vmax.f32 %v1310, 0.0
    %v1375 = vmax.f32 %v1311, 0.0
    %v1376 = vmax.f32 %v1312, 0.0
    %v1377 = vmax.f32 %v1313, 0.0
    %v1378 = vmax.f32 %v1314, 0.0
    %v1379 = vmax.f32 %v1315, 0.0
    %v1380 = vmax.f32 %v1316, 0.0
    %v1381 = vmax.f32 %v1317, 0.0
    %v1382 = vmax.f32 %v1318, 0.0
    %v1383 = vmax.f32 %v1319, 0.0
    %v1384 = vmax.f32 %v1320, 0.0
    %v1385 = vmax.f32 %v1321, 0.0
    %v1386 = vmax.f32 %v1322, 0.0
    %v1387 = vmax.f32 %v1323, 0.0
    %v1388 = vmax.f32 %v1324, 0.0
    %v1389 = vmax.f32 %v1325, 0.0
    %v1390 = vmax.f32 %v1326, 0.0
    %v1391 = vmax.f32 %v1327, 0.0
    %v1392 = vmax.f32 %v1328, 0.0
    %v1393 = vmax.f32 %v1329, 0.0
    %v1394 = vmax.f32 %v1330, 0.0
    %v1395 = vmax.f32 %v1331, 0.0
    %v1396 = vmax.f32 %v1332, 0.0
    %v1397 = vmax.f32 %v1333, 0.0
    %v1398 = vmax.f32 %v1334, 0.0
    %v1399 = vmax.f32 %v1335, 0.0
    %v1400 = vmax.f32 %v1336, 0.0
    %v1401 = vmax.f32 %v1337, 0.0
    %v1402 = vmax.f32 %v1338, 0.0
    %v1403 = vmax.f32 %v1339, 0.0
    %v1404 = vmax.f32 %v1340, 0.0
    %v1405 = vmax.f32 %v1341, 0.0
    %v1406 = vmax.f32 %v1342, 0.0
    %v1407 = vld [vmem:[%s5] sm:$0x3]
    %v1409 = vperm.slane %v1407, 0
    %v1410 = vperm.slane %v1407, 1
    %v1413 = vmul.f32 %v1343, %v1409
    %v1414 = vmul.f32 %v1344, %v1410
    %v1415 = vmul.f32 %v1345, %v1409
    %v1416 = vmul.f32 %v1346, %v1410
    %v1417 = vmul.f32 %v1347, %v1409
    %v1418 = vmul.f32 %v1348, %v1410
    %v1419 = vmul.f32 %v1349, %v1409
    %v1420 = vmul.f32 %v1350, %v1410
    %v1421 = vmul.f32 %v1351, %v1409
    %v1422 = vmul.f32 %v1352, %v1410
    %v1423 = vmul.f32 %v1353, %v1409
    %v1424 = vmul.f32 %v1354, %v1410
    %v1425 = vmul.f32 %v1355, %v1409
    %v1426 = vmul.f32 %v1356, %v1410
    %v1427 = vmul.f32 %v1357, %v1409
    %v1428 = vmul.f32 %v1358, %v1410
    %v1429 = vmul.f32 %v1359, %v1409
    %v1430 = vmul.f32 %v1360, %v1410
    %v1431 = vmul.f32 %v1361, %v1409
    %v1432 = vmul.f32 %v1362, %v1410
    %v1433 = vmul.f32 %v1363, %v1409
    %v1434 = vmul.f32 %v1364, %v1410
    %v1435 = vmul.f32 %v1365, %v1409
    %v1436 = vmul.f32 %v1366, %v1410
    %v1437 = vmul.f32 %v1367, %v1409
    %v1438 = vmul.f32 %v1368, %v1410
    %v1439 = vmul.f32 %v1369, %v1409
    %v1440 = vmul.f32 %v1370, %v1410
    %v1441 = vmul.f32 %v1371, %v1409
    %v1442 = vmul.f32 %v1372, %v1410
    %v1443 = vmul.f32 %v1373, %v1409
    %v1444 = vmul.f32 %v1374, %v1410
    %v1445 = vmul.f32 %v1375, %v1409
    %v1446 = vmul.f32 %v1376, %v1410
    %v1447 = vmul.f32 %v1377, %v1409
    %v1448 = vmul.f32 %v1378, %v1410
    %v1449 = vmul.f32 %v1379, %v1409
    %v1450 = vmul.f32 %v1380, %v1410
    %v1451 = vmul.f32 %v1381, %v1409
    %v1452 = vmul.f32 %v1382, %v1410
    %v1453 = vmul.f32 %v1383, %v1409
    %v1454 = vmul.f32 %v1384, %v1410
    %v1455 = vmul.f32 %v1385, %v1409
    %v1456 = vmul.f32 %v1386, %v1410
    %v1457 = vmul.f32 %v1387, %v1409
    %v1458 = vmul.f32 %v1388, %v1410
    %v1459 = vmul.f32 %v1389, %v1409
    %v1460 = vmul.f32 %v1390, %v1410
    %v1461 = vmul.f32 %v1391, %v1409
    %v1462 = vmul.f32 %v1392, %v1410
    %v1463 = vmul.f32 %v1393, %v1409
    %v1464 = vmul.f32 %v1394, %v1410
    %v1465 = vmul.f32 %v1395, %v1409
    %v1466 = vmul.f32 %v1396, %v1410
    %v1467 = vmul.f32 %v1397, %v1409
    %v1468 = vmul.f32 %v1398, %v1410
    %v1469 = vmul.f32 %v1399, %v1409
    %v1470 = vmul.f32 %v1400, %v1410
    %v1471 = vmul.f32 %v1401, %v1409
    %v1472 = vmul.f32 %v1402, %v1410
    %v1473 = vmul.f32 %v1403, %v1409
    %v1474 = vmul.f32 %v1404, %v1410
    %v1475 = vmul.f32 %v1405, %v1409
    %v1476 = vmul.f32 %v1406, %v1410
    %v1477 = vadd.f32 %v1413, %v1414
    %1478 = vadd.xlane.f32.xlu0 %v1477
    %v1479 = vpop.xlane.xlu0 %1478
    %v1480 = vadd.f32 %v1415, %v1416
    %1481 = vadd.xlane.f32.xlu0 %v1480
    %v1482 = vpop.xlane.xlu0 %1481
    %v1483 = vadd.f32 %v1417, %v1418
    %1484 = vadd.xlane.f32.xlu0 %v1483
    %v1485 = vpop.xlane.xlu0 %1484
    %v1486 = vadd.f32 %v1419, %v1420
    %1487 = vadd.xlane.f32.xlu0 %v1486
    %v1488 = vpop.xlane.xlu0 %1487
    %v1489 = vadd.f32 %v1421, %v1422
    %1490 = vadd.xlane.f32.xlu0 %v1489
    %v1491 = vpop.xlane.xlu0 %1490
    %v1492 = vadd.f32 %v1423, %v1424
    %1493 = vadd.xlane.f32.xlu0 %v1492
    %v1494 = vpop.xlane.xlu0 %1493
    %v1495 = vadd.f32 %v1425, %v1426
    %1496 = vadd.xlane.f32.xlu0 %v1495
    %v1497 = vpop.xlane.xlu0 %1496
    %v1498 = vadd.f32 %v1427, %v1428
    %1499 = vadd.xlane.f32.xlu0 %v1498
    %v1500 = vpop.xlane.xlu0 %1499
    %v1501 = vadd.f32 %v1429, %v1430
    %1502 = vadd.xlane.f32.xlu0 %v1501
    %v1503 = vpop.xlane.xlu0 %1502
    %v1504 = vadd.f32 %v1431, %v1432
    %1505 = vadd.xlane.f32.xlu0 %v1504
    %v1506 = vpop.xlane.xlu0 %1505
    %v1507 = vadd.f32 %v1433, %v1434
    %1508 = vadd.xlane.f32.xlu0 %v1507
    %v1509 = vpop.xlane.xlu0 %1508
    %v1510 = vadd.f32 %v1435, %v1436
    %1511 = vadd.xlane.f32.xlu0 %v1510
    %v1512 = vpop.xlane.xlu0 %1511
    %v1513 = vadd.f32 %v1437, %v1438
    %1514 = vadd.xlane.f32.xlu0 %v1513
    %v1515 = vpop.xlane.xlu0 %1514
    %v1516 = vadd.f32 %v1439, %v1440
    %1517 = vadd.xlane.f32.xlu0 %v1516
    %v1518 = vpop.xlane.xlu0 %1517
    %v1519 = vadd.f32 %v1441, %v1442
    %1520 = vadd.xlane.f32.xlu0 %v1519
    %v1521 = vpop.xlane.xlu0 %1520
    %v1522 = vadd.f32 %v1443, %v1444
    %1523 = vadd.xlane.f32.xlu0 %v1522
    %v1524 = vpop.xlane.xlu0 %1523
    %v1525 = vadd.f32 %v1445, %v1446
    %1526 = vadd.xlane.f32.xlu0 %v1525
    %v1527 = vpop.xlane.xlu0 %1526
    %v1528 = vadd.f32 %v1447, %v1448
    %1529 = vadd.xlane.f32.xlu0 %v1528
    %v1530 = vpop.xlane.xlu0 %1529
    %v1531 = vadd.f32 %v1449, %v1450
    %1532 = vadd.xlane.f32.xlu0 %v1531
    %v1533 = vpop.xlane.xlu0 %1532
    %v1534 = vadd.f32 %v1451, %v1452
    %1535 = vadd.xlane.f32.xlu0 %v1534
    %v1536 = vpop.xlane.xlu0 %1535
    %v1537 = vadd.f32 %v1453, %v1454
    %1538 = vadd.xlane.f32.xlu0 %v1537
    %v1539 = vpop.xlane.xlu0 %1538
    %v1540 = vadd.f32 %v1455, %v1456
    %1541 = vadd.xlane.f32.xlu0 %v1540
    %v1542 = vpop.xlane.xlu0 %1541
    %v1543 = vadd.f32 %v1457, %v1458
    %1544 = vadd.xlane.f32.xlu0 %v1543
    %v1545 = vpop.xlane.xlu0 %1544
    %v1546 = vadd.f32 %v1459, %v1460
    %1547 = vadd.xlane.f32.xlu0 %v1546
    %v1548 = vpop.xlane.xlu0 %1547
    %v1549 = vadd.f32 %v1461, %v1462
    %1550 = vadd.xlane.f32.xlu0 %v1549
    %v1551 = vpop.xlane.xlu0 %1550
    %v1552 = vadd.f32 %v1463, %v1464
    %1553 = vadd.xlane.f32.xlu0 %v1552
    %v1554 = vpop.xlane.xlu0 %1553
    %v1555 = vadd.f32 %v1465, %v1466
    %1556 = vadd.xlane.f32.xlu0 %v1555
    %v1557 = vpop.xlane.xlu0 %1556
    %v1558 = vadd.f32 %v1467, %v1468
    %1559 = vadd.xlane.f32.xlu0 %v1558
    %v1560 = vpop.xlane.xlu0 %1559
    %v1561 = vadd.f32 %v1469, %v1470
    %1562 = vadd.xlane.f32.xlu0 %v1561
    %v1563 = vpop.xlane.xlu0 %1562
    %v1564 = vadd.f32 %v1471, %v1472
    %1565 = vadd.xlane.f32.xlu0 %v1564
    %v1566 = vpop.xlane.xlu0 %1565
    %v1567 = vadd.f32 %v1473, %v1474
    %1568 = vadd.xlane.f32.xlu0 %v1567
    %v1569 = vpop.xlane.xlu0 %1568
    %v1570 = vadd.f32 %v1475, %v1476
    %1571 = vadd.xlane.f32.xlu0 %v1570
    %v1572 = vpop.xlane.xlu0 %1571
    %v1573 = vld [vmem:[#allocation2] sm:$0x1]
    %v1575 = vperm.slane %v1573, 0
    %v1577 = vadd.f32 %v1479, %v1575
    %v1578 = vadd.f32 %v1482, %v1575
    %v1579 = vadd.f32 %v1485, %v1575
    %v1580 = vadd.f32 %v1488, %v1575
    %v1581 = vadd.f32 %v1491, %v1575
    %v1582 = vadd.f32 %v1494, %v1575
    %v1583 = vadd.f32 %v1497, %v1575
    %v1584 = vadd.f32 %v1500, %v1575
    %v1585 = vadd.f32 %v1503, %v1575
    %v1586 = vadd.f32 %v1506, %v1575
    %v1587 = vadd.f32 %v1509, %v1575
    %v1588 = vadd.f32 %v1512, %v1575
    %v1589 = vadd.f32 %v1515, %v1575
    %v1590 = vadd.f32 %v1518, %v1575
    %v1591 = vadd.f32 %v1521, %v1575
    %v1592 = vadd.f32 %v1524, %v1575
    %v1593 = vadd.f32 %v1527, %v1575
    %v1594 = vadd.f32 %v1530, %v1575
    %v1595 = vadd.f32 %v1533, %v1575
    %v1596 = vadd.f32 %v1536, %v1575
    %v1597 = vadd.f32 %v1539, %v1575
    %v1598 = vadd.f32 %v1542, %v1575
    %v1599 = vadd.f32 %v1545, %v1575
    %v1600 = vadd.f32 %v1548, %v1575
    %v1601 = vadd.f32 %v1551, %v1575
    %v1602 = vadd.f32 %v1554, %v1575
    %v1603 = vadd.f32 %v1557, %v1575
    %v1604 = vadd.f32 %v1560, %v1575
    %v1605 = vadd.f32 %v1563, %v1575
    %v1606 = vadd.f32 %v1566, %v1575
    %v1607 = vadd.f32 %v1569, %v1575
    %v1608 = vadd.f32 %v1572, %v1575
    %vm1609 = vcmask 7168
    %1610 = vst.msk [vmem:[%s7] sm:$0xff] %vm1609, %v1577
    %1611 = vst.msk [vmem:[%s7 + $0x8] sm:$0xff] %vm1609, %v1578
    %1612 = vst.msk [vmem:[%s7 + $0x10] sm:$0xff] %vm1609, %v1579
    %1613 = vst.msk [vmem:[%s7 + $0x18] sm:$0xff] %vm1609, %v1580
    %1614 = vst.msk [vmem:[%s7 + $0x20] sm:$0xff] %vm1609, %v1581
    %1615 = vst.msk [vmem:[%s7 + $0x28] sm:$0xff] %vm1609, %v1582
    %1616 = vst.msk [vmem:[%s7 + $0x30] sm:$0xff] %vm1609, %v1583
    %1617 = vst.msk [vmem:[%s7 + $0x38] sm:$0xff] %vm1609, %v1584
    %1618 = vst.msk [vmem:[%s7 + $0x40] sm:$0xff] %vm1609, %v1585
    %1619 = vst.msk [vmem:[%s7 + $0x48] sm:$0xff] %vm1609, %v1586
    %1620 = vst.msk [vmem:[%s7 + $0x50] sm:$0xff] %vm1609, %v1587
    %1621 = vst.msk [vmem:[%s7 + $0x58] sm:$0xff] %vm1609, %v1588
    %1622 = vst.msk [vmem:[%s7 + $0x60] sm:$0xff] %vm1609, %v1589
    %1623 = vst.msk [vmem:[%s7 + $0x68] sm:$0xff] %vm1609, %v1590
    %1624 = vst.msk [vmem:[%s7 + $0x70] sm:$0xff] %vm1609, %v1591
    %1625 = vst.msk [vmem:[%s7 + $0x78] sm:$0xff] %vm1609, %v1592
    %1626 = vst.msk [vmem:[%s7 + $0x80] sm:$0xff] %vm1609, %v1593
    %1627 = vst.msk [vmem:[%s7 + $0x88] sm:$0xff] %vm1609, %v1594
    %1628 = vst.msk [vmem:[%s7 + $0x90] sm:$0xff] %vm1609, %v1595
    %1629 = vst.msk [vmem:[%s7 + $0x98] sm:$0xff] %vm1609, %v1596
    %1630 = vst.msk [vmem:[%s7 + $0xa0] sm:$0xff] %vm1609, %v1597
    %1631 = vst.msk [vmem:[%s7 + $0xa8] sm:$0xff] %vm1609, %v1598
    %1632 = vst.msk [vmem:[%s7 + $0xb0] sm:$0xff] %vm1609, %v1599
    %1633 = vst.msk [vmem:[%s7 + $0xb8] sm:$0xff] %vm1609, %v1600
    %1634 = vst.msk [vmem:[%s7 + $0xc0] sm:$0xff] %vm1609, %v1601
    %1635 = vst.msk [vmem:[%s7 + $0xc8] sm:$0xff] %vm1609, %v1602
    %1636 = vst.msk [vmem:[%s7 + $0xd0] sm:$0xff] %vm1609, %v1603
    %1637 = vst.msk [vmem:[%s7 + $0xd8] sm:$0xff] %vm1609, %v1604
    %1638 = vst.msk [vmem:[%s7 + $0xe0] sm:$0xff] %vm1609, %v1605
    %1639 = vst.msk [vmem:[%s7 + $0xe8] sm:$0xff] %vm1609, %v1606
    %1640 = vst.msk [vmem:[%s7 + $0xf0] sm:$0xff] %vm1609, %v1607
    %1641 = vst.msk [vmem:[%s7 + $0xf8] sm:$0xff] %vm1609, %v1608
    // Predicated region
    $region42: #{tpu_custom_call.1} parent=1 // pred_check
      _
    $region43: #{tpu_custom_call.1} parent=1 // pred_check_branch
      %1643 = sbr.rel (0) target = $region45
    $region44: #{tpu_custom_call.1} parent=1 // pred_region
      _
    $region45: #{tpu_custom_call.1} parent=1 // pred_fallthru
      _
    // Predicated region
    $region46: #{tpu_custom_call.1} parent=1 // pred_check
      _
    $region47: #{tpu_custom_call.1} parent=1 // pred_check_branch
      %1645 = sbr.rel (0) target = $region49
    $region48: #{tpu_custom_call.1} parent=1 // pred_region
      _
    $region49: #{tpu_custom_call.1} parent=1 // pred_fallthru
      _
    %1646 = vsyncpa [#allocation4], 1
    %1647 = vsyncpa [#allocation6], 1

</llo_original>
